<compile_context>
chip_gen: v7x
topology: tpu7x:2x2x1
jax: 0.10.0
libtpu: 0.0.40
codegen_flags: <defaults>
</compile_context>

<pallas_src>
import numpy as np
import jax
import jax.numpy as jnp
from jax.experimental import pallas as pl
from jax.experimental.pallas import tpu as pltpu


# --------------------------------------------------------------------------
# Mask construction (identical to MaskedConv2d.__init__, over OIHW weights)
# --------------------------------------------------------------------------
def build_mask(mask_type, out_ch, in_ch, kH, kW):
    assert mask_type in {"A", "B"}
    mask = np.ones((out_ch, in_ch, kH, kW), np.float32)
    mask[:, :, kH // 2, kW // 2 + (mask_type == "B"):] = 0.0
    mask[:, :, kH // 2 + 1:, :] = 0.0
    return jnp.asarray(mask)


def surviving_taps(mask_type, kH, kW):
    """Kernel taps (kh, kw) NOT zeroed by the PixelCNN mask (whole taps only)."""
    taps = []
    for kh in range(kH):
        for kw in range(kW):
            if kh < kH // 2 or (kh == kH // 2 and kw < kW // 2 + (mask_type == "B")):
                taps.append((kh, kw))
    return taps


# --------------------------------------------------------------------------
# Fused kernel:
#   BN1 -> ReLU -> masked conv1 (with BN2 pre-folded) -> ReLU -> masked conv2 -> +x
# --------------------------------------------------------------------------
def _make_res_unit_kernel(H, W, C, O, pad, taps):
    def masked_conv(pad_ref, w_ref, b_ref):
        # im2col: stack the shifted (H, W, C) windows of the surviving taps
        # along the lane axis -> (H*W, T*C), then one MXU matmul.
        cols = []
        for kh, kw in taps:
            win = pad_ref[pl.ds(kh, H), pl.ds(kw, W), :]       # (H, W, C)
            cols.append(win.reshape(H * W, C))
        patches = jnp.concatenate(cols, axis=-1)               # (H*W, T*C)
        y = jnp.dot(patches, w_ref[...], preferred_element_type=jnp.float32)
        return y + b_ref[...]                                   # (H*W, O)

    def kernel(x_ref, s1_ref, t1_ref, w1_ref, c1_ref, w2_ref, b2_ref,
               o_ref, pad_ref):
        x = x_ref[0].astype(jnp.float32)                        # (H, W, C)

        # zero the padded scratch once (border must be zero for 'same' padding)
        pad_ref[...] = jnp.zeros_like(pad_ref)

        # ---- stage 1: BN1 (folded scale/shift) + ReLU + masked conv1 ----
        # w1/c1 already carry BN2's scale/shift, so h1 == bn2(conv1(relu(bn1(x))))
        a1 = jnp.maximum(x * s1_ref[...] + t1_ref[...], 0.0)
        pad_ref[pl.ds(pad, H), pl.ds(pad, W), :] = a1
        h1 = masked_conv(pad_ref, w1_ref, c1_ref)               # (H*W, O)

        # ---- stage 2: ReLU + masked conv2 ----
        a2 = jnp.maximum(h1, 0.0).reshape(H, W, O)
        pad_ref[pl.ds(pad, H), pl.ds(pad, W), :] = a2
        h2 = masked_conv(pad_ref, w2_ref, b2_ref).reshape(H, W, O)

        # ---- residual ----
        o_ref[0] = (x + h2).astype(o_ref.dtype)

    return kernel


# --------------------------------------------------------------------------
# Wrapper: PyTorch NCHW / OIHW convention in & out
# --------------------------------------------------------------------------
def masked_res_unit(x_nchw, w1, b1, w2, b2,
                    g1, be1, m1, v1, g2, be2, m2, v2,
                    mask_type="B", padding=1, eps=1e-5):
    O, C, kH, kW = w1.shape
    N, Cx, H, W = x_nchw.shape
    assert Cx == C and O == C, "res unit needs out_channels == in_channels"
    assert 2 * padding == kH - 1 and 2 * padding == kW - 1, "need 'same' conv"

    taps = surviving_taps(mask_type, kH, kW)
    mask = build_mask(mask_type, O, C, kH, kW)

    # ---- glue: mask + im2col-pack the weights (surviving taps only) ----
    def pack_weights(w):
        w_hwio = jnp.transpose(w * mask, (2, 3, 1, 0))          # (kH, kW, C, O)
        return jnp.concatenate([w_hwio[kh, kw] for kh, kw in taps], axis=0)

    # ---- glue: fold BatchNorm (inference mode) into scale / shift ----
    s1v = g1 / jnp.sqrt(v1 + eps)
    t1v = be1 - m1 * s1v
    s2v = g2 / jnp.sqrt(v2 + eps)
    t2v = be2 - m2 * s2v

    # BN2 acts per output channel of conv1 -> fold it into conv1's weights/bias:
    #   bn2(patches @ W1 + b1) = patches @ (W1 * s2) + (b1 * s2 + t2)
    w1c = pack_weights(w1) * s2v[None, :]                       # (T*C, O)
    c1 = (b1 * s2v + t2v).reshape(1, O)
    w2c = pack_weights(w2)                                      # (T*C, O)
    b2r = b2.reshape(1, O)
    K = len(taps) * C

    s1 = s1v.reshape(1, 1, C)
    t1 = t1v.reshape(1, 1, C)

    # ---- glue: NCHW -> NHWC ----
    x_nhwc = jnp.transpose(x_nchw, (0, 2, 3, 1))                # (N, H, W, C)
    Hp, Wp = H + 2 * padding, W + 2 * padding

    kernel = _make_res_unit_kernel(H, W, C, O, padding, taps)

    out_nhwc = pl.pallas_call(
        kernel,
        out_shape=jax.ShapeDtypeStruct((N, H, W, O), x_nchw.dtype),
        grid_spec=pltpu.PrefetchScalarGridSpec(
            num_scalar_prefetch=0,
            grid=(N,),
            in_specs=[
                pl.BlockSpec((1, H, W, C), lambda n: (n, 0, 0, 0)),   # x
                pl.BlockSpec((1, 1, C), lambda n: (0, 0, 0)),         # bn1 scale
                pl.BlockSpec((1, 1, C), lambda n: (0, 0, 0)),         # bn1 shift
                pl.BlockSpec((K, O), lambda n: (0, 0)),               # w1 (im2col, BN2-folded)
                pl.BlockSpec((1, O), lambda n: (0, 0)),               # conv1 bias (BN2-folded)
                pl.BlockSpec((K, O), lambda n: (0, 0)),               # w2 (im2col)
                pl.BlockSpec((1, O), lambda n: (0, 0)),               # b2
            ],
            out_specs=pl.BlockSpec((1, H, W, O), lambda n: (n, 0, 0, 0)),
            scratch_shapes=[pltpu.VMEM((Hp, Wp, C), jnp.float32)],    # padded act
        ),
        compiler_params=pltpu.CompilerParams(
            dimension_semantics=("parallel",),
        ),
    )(x_nhwc, s1, t1, w1c, c1, w2c, b2r)

    # back to PyTorch NCHW convention
    return jnp.transpose(out_nhwc, (0, 3, 1, 2))


# --------------------------------------------------------------------------
# Pure-JAX reference (same semantics as the PyTorch module in eval mode)
# --------------------------------------------------------------------------
def ref_res_unit(x, w1, b1, w2, b2, g1, be1, m1, v1, g2, be2, m2, v2,
                 mask_type, padding, eps=1e-5):
    O, C, kH, kW = w1.shape
    mask = build_mask(mask_type, O, C, kH, kW)

    def bn(x, g, b, m, v):
        inv = g / jnp.sqrt(v + eps)
        return x * inv[None, :, None, None] + (b - m * inv)[None, :, None, None]

    def conv(x, w, b):
        y = jax.lax.conv_general_dilated(
            x, w * mask, window_strides=(1, 1),
            padding=((padding, padding), (padding, padding)),
            dimension_numbers=("NCHW", "OIHW", "NCHW"))
        return y + b[None, :, None, None]

    a1 = jnp.maximum(bn(x, g1, be1, m1, v1), 0.0)
    h1 = conv(a1, w1, b1)
    a2 = jnp.maximum(bn(h1, g2, be2, m2, v2), 0.0)
    h2 = conv(a2, w2, b2)
    return x + h2


if __name__ == "__main__":
    # Module hard-codes BatchNorm2d(64) => 64 channels in/out.
    # MaskedResUnit(mask_type, 64, 64, 3, padding=1)
    N, C, H, W = 2, 64, 16, 16
    O, kH, kW = 64, 3, 3
    padding = 1

    key = jax.random.PRNGKey(0)
    ks = jax.random.split(key, 13)

    x = jax.random.normal(ks[0], (N, C, H, W), dtype=jnp.float32)

    fan_in = C * kH * kW
    bound = 1.0 / np.sqrt(fan_in)
    w1 = jax.random.uniform(ks[1], (O, C, kH, kW), jnp.float32, -bound, bound)
    b1 = jax.random.uniform(ks[2], (O,), jnp.float32, -bound, bound)
    w2 = jax.random.uniform(ks[3], (O, C, kH, kW), jnp.float32, -bound, bound)
    b2 = jax.random.uniform(ks[4], (O,), jnp.float32, -bound, bound)

    # non-trivial BatchNorm parameters / running stats (inference mode)
    g1 = jax.random.uniform(ks[5], (C,), jnp.float32, 0.5, 1.5)
    be1 = 0.1 * jax.random.normal(ks[6], (C,), jnp.float32)
    m1 = 0.1 * jax.random.normal(ks[7], (C,), jnp.float32)
    v1 = jax.random.uniform(ks[8], (C,), jnp.float32, 0.5, 1.5)
    g2 = jax.random.uniform(ks[9], (C,), jnp.float32, 0.5, 1.5)
    be2 = 0.1 * jax.random.normal(ks[10], (C,), jnp.float32)
    m2 = 0.1 * jax.random.normal(ks[11], (C,), jnp.float32)
    v2 = jax.random.uniform(ks[12], (C,), jnp.float32, 0.5, 1.5)

    for mask_type in ("A", "B"):
        fn = jax.jit(lambda *a, mt=mask_type: masked_res_unit(
            *a, mask_type=mt, padding=padding))
        out = fn(x, w1, b1, w2, b2, g1, be1, m1, v1, g2, be2, m2, v2)
        out = jax.block_until_ready(out)
        assert out.shape == (N, O, H, W), out.shape

        ref = ref_res_unit(x, w1, b1, w2, b2,
                           g1, be1, m1, v1, g2, be2, m2, v2,
                           mask_type, padding)
        np.testing.assert_allclose(np.asarray(out), np.asarray(ref),
                                   rtol=1e-4, atol=1e-4)

    print("KERNEL_OK")
</pallas_src>

<mosaic_0001>
module attributes {stable_mosaic.version = 11 : i64} {
  func.func @kernel(%arg0: i32, %arg1: memref<1x16x16x64xf32, #tpu.memory_space<vmem>>, %arg2: memref<1x1x64xf32, #tpu.memory_space<vmem>>, %arg3: memref<1x1x64xf32, #tpu.memory_space<vmem>>, %arg4: memref<256x64xf32, #tpu.memory_space<vmem>>, %arg5: memref<1x64xf32, #tpu.memory_space<vmem>>, %arg6: memref<256x64xf32, #tpu.memory_space<vmem>>, %arg7: memref<1x64xf32, #tpu.memory_space<vmem>>, %arg8: memref<1x16x16x64xf32, #tpu.memory_space<vmem>>, %arg9: memref<18x18x64xf32, #tpu.memory_space<vmem>>) attributes {dimension_semantics = [#tpu.dimension_semantics<parallel>], iteration_bounds = array<i64: 2>, scalar_prefetch = 0 : i64, scratch_operands = 1 : i64, tpu.core_type = #tpu.core_type<tc>, window_params = [{transform_indices = @transform_0, window_bounds = array<i64: 1, 16, 16, 64>}, {pipeline_mode = #tpu.pipeline_mode<synchronous>, transform_indices = @transform_1, window_bounds = array<i64: 1, 1, 64>}, {pipeline_mode = #tpu.pipeline_mode<synchronous>, transform_indices = @transform_2, window_bounds = array<i64: 1, 1, 64>}, {pipeline_mode = #tpu.pipeline_mode<synchronous>, transform_indices = @transform_3, window_bounds = array<i64: 256, 64>}, {pipeline_mode = #tpu.pipeline_mode<synchronous>, transform_indices = @transform_4, window_bounds = array<i64: 1, 64>}, {pipeline_mode = #tpu.pipeline_mode<synchronous>, transform_indices = @transform_5, window_bounds = array<i64: 256, 64>}, {pipeline_mode = #tpu.pipeline_mode<synchronous>, transform_indices = @transform_6, window_bounds = array<i64: 1, 64>}, {transform_indices = @transform_7, window_bounds = array<i64: 1, 16, 16, 64>}]} {
    %c0 = arith.constant 0 : index
    %c0_0 = arith.constant 0 : index
    %c0_1 = arith.constant 0 : index
    %c0_2 = arith.constant 0 : index
    %0 = vector.load %arg1[%c0, %c0_0, %c0_1, %c0_2] : memref<1x16x16x64xf32, #tpu.memory_space<vmem>>, vector<1x16x16x64xf32>
    %1 = vector.shape_cast %0 : vector<1x16x16x64xf32> to vector<16x16x64xf32>
    %cst = arith.constant 0.000000e+00 : f32
    %2 = vector.broadcast %cst : f32 to vector<18x18x64xf32>
    %c0_3 = arith.constant 0 : index
    %c0_4 = arith.constant 0 : index
    %c0_5 = arith.constant 0 : index
    %3 = vector.load %arg9[%c0_3, %c0_4, %c0_5] : memref<18x18x64xf32, #tpu.memory_space<vmem>>, vector<18x18x64xf32>
    tpu.vector_store %arg9[%c0_3, %c0_4, %c0_5], %2 {strides = array<i32>} : memref<18x18x64xf32, #tpu.memory_space<vmem>>, vector<18x18x64xf32>,
    %c0_6 = arith.constant 0 : index
    %c0_7 = arith.constant 0 : index
    %c0_8 = arith.constant 0 : index
    %4 = vector.load %arg2[%c0_6, %c0_7, %c0_8] : memref<1x1x64xf32, #tpu.memory_space<vmem>>, vector<1x1x64xf32>
    %5 = vector.broadcast %4 : vector<1x1x64xf32> to vector<16x16x64xf32>
    %6 = arith.mulf %1, %5 : vector<16x16x64xf32>
    %c0_9 = arith.constant 0 : index
    %c0_10 = arith.constant 0 : index
    %c0_11 = arith.constant 0 : index
    %7 = vector.load %arg3[%c0_9, %c0_10, %c0_11] : memref<1x1x64xf32, #tpu.memory_space<vmem>>, vector<1x1x64xf32>
    %8 = vector.broadcast %7 : vector<1x1x64xf32> to vector<16x16x64xf32>
    %9 = arith.addf %6, %8 : vector<16x16x64xf32>
    %cst_12 = arith.constant 0.000000e+00 : f32
    %10 = vector.broadcast %cst_12 : f32 to vector<16x16x64xf32>
    %11 = arith.maximumf %9, %10 : vector<16x16x64xf32>
    %c1 = arith.constant 1 : index
    %c1_13 = arith.constant 1 : index
    %c0_14 = arith.constant 0 : index
    %12 = vector.load %arg9[%c1, %c1_13, %c0_14] : memref<18x18x64xf32, #tpu.memory_space<vmem>>, vector<16x16x64xf32>
    tpu.vector_store %arg9[%c1, %c1_13, %c0_14], %11 {strides = array<i32>} : memref<18x18x64xf32, #tpu.memory_space<vmem>>, vector<16x16x64xf32>,
    %c0_15 = arith.constant 0 : index
    %c0_16 = arith.constant 0 : index
    %c0_17 = arith.constant 0 : index
    %13 = vector.load %arg9[%c0_15, %c0_16, %c0_17] : memref<18x18x64xf32, #tpu.memory_space<vmem>>, vector<16x16x64xf32>
    %14 = vector.shape_cast %13 : vector<16x16x64xf32> to vector<256x64xf32>
    %c0_18 = arith.constant 0 : index
    %c1_19 = arith.constant 1 : index
    %c0_20 = arith.constant 0 : index
    %15 = vector.load %arg9[%c0_18, %c1_19, %c0_20] : memref<18x18x64xf32, #tpu.memory_space<vmem>>, vector<16x16x64xf32>
    %16 = vector.shape_cast %15 : vector<16x16x64xf32> to vector<256x64xf32>
    %c0_21 = arith.constant 0 : index
    %c2 = arith.constant 2 : index
    %c0_22 = arith.constant 0 : index
    %17 = vector.load %arg9[%c0_21, %c2, %c0_22] : memref<18x18x64xf32, #tpu.memory_space<vmem>>, vector<16x16x64xf32>
    %18 = vector.shape_cast %17 : vector<16x16x64xf32> to vector<256x64xf32>
    %c1_23 = arith.constant 1 : index
    %c0_24 = arith.constant 0 : index
    %c0_25 = arith.constant 0 : index
    %19 = vector.load %arg9[%c1_23, %c0_24, %c0_25] : memref<18x18x64xf32, #tpu.memory_space<vmem>>, vector<16x16x64xf32>
    %20 = vector.shape_cast %19 : vector<16x16x64xf32> to vector<256x64xf32>
    %21 = tpu.concatenate %14, %16, %18, %20 in 1 : vector<256x64xf32>, vector<256x64xf32>, vector<256x64xf32>, vector<256x64xf32> -> vector<256x256xf32>
    %c0_26 = arith.constant 0 : index
    %c0_27 = arith.constant 0 : index
    %22 = vector.load %arg4[%c0_26, %c0_27] : memref<256x64xf32, #tpu.memory_space<vmem>>, vector<256x64xf32>
    %cst_28 = arith.constant dense<0.000000e+00> : vector<256x64xf32>
    %23 = tpu.matmul %21, %22, %cst_28 {dimension_numbers = #tpu.dot_dimension_numbers<[1], [0], [0], [1], [0, 0, 1, 1], [], []>} : vector<256x256xf32>, vector<256x64xf32>, vector<256x64xf32> -> vector<256x64xf32>
    %c0_29 = arith.constant 0 : index
    %c0_30 = arith.constant 0 : index
    %24 = vector.load %arg5[%c0_29, %c0_30] : memref<1x64xf32, #tpu.memory_space<vmem>>, vector<1x64xf32>
    %25 = vector.broadcast %24 : vector<1x64xf32> to vector<256x64xf32>
    %26 = arith.addf %23, %25 : vector<256x64xf32>
    %cst_31 = arith.constant 0.000000e+00 : f32
    %27 = vector.broadcast %cst_31 : f32 to vector<256x64xf32>
    %28 = arith.maximumf %26, %27 : vector<256x64xf32>
    %29 = vector.shape_cast %28 : vector<256x64xf32> to vector<16x16x64xf32>
    %c1_32 = arith.constant 1 : index
    %c1_33 = arith.constant 1 : index
    %c0_34 = arith.constant 0 : index
    %30 = vector.load %arg9[%c1_32, %c1_33, %c0_34] : memref<18x18x64xf32, #tpu.memory_space<vmem>>, vector<16x16x64xf32>
    tpu.vector_store %arg9[%c1_32, %c1_33, %c0_34], %29 {strides = array<i32>} : memref<18x18x64xf32, #tpu.memory_space<vmem>>, vector<16x16x64xf32>,
    %c0_35 = arith.constant 0 : index
    %c0_36 = arith.constant 0 : index
    %c0_37 = arith.constant 0 : index
    %31 = vector.load %arg9[%c0_35, %c0_36, %c0_37] : memref<18x18x64xf32, #tpu.memory_space<vmem>>, vector<16x16x64xf32>
    %32 = vector.shape_cast %31 : vector<16x16x64xf32> to vector<256x64xf32>
    %c0_38 = arith.constant 0 : index
    %c1_39 = arith.constant 1 : index
    %c0_40 = arith.constant 0 : index
    %33 = vector.load %arg9[%c0_38, %c1_39, %c0_40] : memref<18x18x64xf32, #tpu.memory_space<vmem>>, vector<16x16x64xf32>
    %34 = vector.shape_cast %33 : vector<16x16x64xf32> to vector<256x64xf32>
    %c0_41 = arith.constant 0 : index
    %c2_42 = arith.constant 2 : index
    %c0_43 = arith.constant 0 : index
    %35 = vector.load %arg9[%c0_41, %c2_42, %c0_43] : memref<18x18x64xf32, #tpu.memory_space<vmem>>, vector<16x16x64xf32>
    %36 = vector.shape_cast %35 : vector<16x16x64xf32> to vector<256x64xf32>
    %c1_44 = arith.constant 1 : index
    %c0_45 = arith.constant 0 : index
    %c0_46 = arith.constant 0 : index
    %37 = vector.load %arg9[%c1_44, %c0_45, %c0_46] : memref<18x18x64xf32, #tpu.memory_space<vmem>>, vector<16x16x64xf32>
    %38 = vector.shape_cast %37 : vector<16x16x64xf32> to vector<256x64xf32>
    %39 = tpu.concatenate %32, %34, %36, %38 in 1 : vector<256x64xf32>, vector<256x64xf32>, vector<256x64xf32>, vector<256x64xf32> -> vector<256x256xf32>
    %c0_47 = arith.constant 0 : index
    %c0_48 = arith.constant 0 : index
    %40 = vector.load %arg6[%c0_47, %c0_48] : memref<256x64xf32, #tpu.memory_space<vmem>>, vector<256x64xf32>
    %cst_49 = arith.constant dense<0.000000e+00> : vector<256x64xf32>
    %41 = tpu.matmul %39, %40, %cst_49 {dimension_numbers = #tpu.dot_dimension_numbers<[1], [0], [0], [1], [0, 0, 1, 1], [], []>} : vector<256x256xf32>, vector<256x64xf32>, vector<256x64xf32> -> vector<256x64xf32>
    %c0_50 = arith.constant 0 : index
    %c0_51 = arith.constant 0 : index
    %42 = vector.load %arg7[%c0_50, %c0_51] : memref<1x64xf32, #tpu.memory_space<vmem>>, vector<1x64xf32>
    %43 = vector.broadcast %42 : vector<1x64xf32> to vector<256x64xf32>
    %44 = arith.addf %41, %43 : vector<256x64xf32>
    %45 = vector.shape_cast %44 : vector<256x64xf32> to vector<16x16x64xf32>
    %46 = arith.addf %1, %45 : vector<16x16x64xf32>
    %c0_52 = arith.constant 0 : index
    %c0_53 = arith.constant 0 : index
    %c0_54 = arith.constant 0 : index
    %c0_55 = arith.constant 0 : index
    %47 = vector.load %arg8[%c0_52, %c0_53, %c0_54, %c0_55] : memref<1x16x16x64xf32, #tpu.memory_space<vmem>>, vector<1x16x16x64xf32>
    %48 = vector.shape_cast %47 : vector<1x16x16x64xf32> to vector<16x16x64xf32>
    %49 = vector.shape_cast %46 : vector<16x16x64xf32> to vector<1x16x16x64xf32>
    tpu.vector_store %arg8[%c0_52, %c0_53, %c0_54, %c0_55], %49 {strides = array<i32>} : memref<1x16x16x64xf32, #tpu.memory_space<vmem>>, vector<1x16x16x64xf32>,
    return
  }
  func.func @transform_0(%arg0: i32) -> (i32, i32, i32, i32) {
    %c0_i32 = arith.constant 0 : i32
    %c0_i32_0 = arith.constant 0 : i32
    %c0_i32_1 = arith.constant 0 : i32
    %c0_i32_2 = arith.constant 0 : i32
    return %arg0, %c0_i32, %c0_i32_0, %c0_i32_1 : i32, i32, i32, i32
  }
  func.func @transform_1(%arg0: i32) -> (i32, i32, i32) {
    %c0_i32 = arith.constant 0 : i32
    %c0_i32_0 = arith.constant 0 : i32
    %c0_i32_1 = arith.constant 0 : i32
    %c0_i32_2 = arith.constant 0 : i32
    return %c0_i32, %c0_i32_0, %c0_i32_1 : i32, i32, i32
  }
  func.func @transform_2(%arg0: i32) -> (i32, i32, i32) {
    %c0_i32 = arith.constant 0 : i32
    %c0_i32_0 = arith.constant 0 : i32
    %c0_i32_1 = arith.constant 0 : i32
    %c0_i32_2 = arith.constant 0 : i32
    return %c0_i32, %c0_i32_0, %c0_i32_1 : i32, i32, i32
  }
  func.func @transform_3(%arg0: i32) -> (i32, i32) {
    %c0_i32 = arith.constant 0 : i32
    %c0_i32_0 = arith.constant 0 : i32
    %c0_i32_1 = arith.constant 0 : i32
    return %c0_i32, %c0_i32_0 : i32, i32
  }
  func.func @transform_4(%arg0: i32) -> (i32, i32) {
    %c0_i32 = arith.constant 0 : i32
    %c0_i32_0 = arith.constant 0 : i32
    %c0_i32_1 = arith.constant 0 : i32
    return %c0_i32, %c0_i32_0 : i32, i32
  }
  func.func @transform_5(%arg0: i32) -> (i32, i32) {
    %c0_i32 = arith.constant 0 : i32
    %c0_i32_0 = arith.constant 0 : i32
    %c0_i32_1 = arith.constant 0 : i32
    return %c0_i32, %c0_i32_0 : i32, i32
  }
  func.func @transform_6(%arg0: i32) -> (i32, i32) {
    %c0_i32 = arith.constant 0 : i32
    %c0_i32_0 = arith.constant 0 : i32
    %c0_i32_1 = arith.constant 0 : i32
    return %c0_i32, %c0_i32_0 : i32, i32
  }
  func.func @transform_7(%arg0: i32) -> (i32, i32, i32, i32) {
    %c0_i32 = arith.constant 0 : i32
    %c0_i32_0 = arith.constant 0 : i32
    %c0_i32_1 = arith.constant 0 : i32
    %c0_i32_2 = arith.constant 0 : i32
    return %arg0, %c0_i32, %c0_i32_0, %c0_i32_1 : i32, i32, i32, i32
  }
}

</mosaic_0001>

<llo_original>
// kernel: _lambda_.1
$region0: #{_lambda_.1}
  #allocation0 [shape = 'u32[]', space=smem, size = 0x4, offset = 0x4, fixed_abs, tag = 'smem constant byte address 0x4 - core index']
  #allocation1 [shape = 'u32[144,128]{1,0:T(1,128)}', space=vmem, size = 0x12000, scoped, tag = 'internal scratch']
  #allocation2 [shape = 'f32[18,18,64]{2,1,0:T(8,128)}', space=vmem, size = 0x36000, scoped, tag = 'scratch operand']
  %s0 = inlined_call_operand.vmem [shape: f32[2,16,16,64], index: 0, kind: input, shape index: {}]
  %s1 = inlined_call_operand.vmem [shape: f32[1,1,64], index: 1, kind: input, shape index: {}]
  %s2 = inlined_call_operand.vmem [shape: f32[1,1,64], index: 2, kind: input, shape index: {}]
  %s3 = inlined_call_operand.vmem [shape: f32[256,64], index: 3, kind: input, shape index: {}]
  %s4 = inlined_call_operand.vmem [shape: f32[1,64], index: 4, kind: input, shape index: {}]
  %s5 = inlined_call_operand.vmem [shape: f32[256,64], index: 5, kind: input, shape index: {}]
  %s6 = inlined_call_operand.vmem [shape: f32[1,64], index: 6, kind: input, shape index: {}]
  %s7 = inlined_call_operand.hbm [shape: f32[2,16,16,64], index: 7, kind: output, shape index: {}]
  %s8 = sld [smem:[#allocation0]]
  $region61: #{_lambda_.1} parent=0
    _
  %s10 = ssub.s32 1, %s8
  %s11 = scalar_select 0, %s10, %s8
  $region1: #{_lambda_.1} parent=0
    #allocation3 [shape = 'u8[262144]{0}', space=vmem, size = 0x40000, scoped, tag = 'output window, operand 0']
    #allocation4 [shape = 's32[2]{0}', space=sflag, size = 0x8, scoped, tag = 'scoped memory for _lambda_.1']
    %12 = vsyncpa [#allocation4], 0
    %s13 = scalar_lea.sflag [#allocation4], 1
    %14 = vsyncpa %s13, 0
    loop: start=0, step=1, limit=4
    $region2: #{_lambda_.1} parent=1 // loop_pre_header
      _
    $region3: #{_lambda_.1} parent=1 // loop_header
      %s16 = sphi 0, %s20
      %p17 = scmp.ge.s32.totalorder %s16, 4
      %s26 = sphi 0, %s28
      %s29 = sphi 0, %s26
      %s30 = sphi 0, %s29
      %s46 = sphi 0, %s30
      %s50 = sphi 0, %s50
      %s52 = sphi 0, %s50
      %s53 = sphi 0, %s52
      %s67 = sphi 0, %s53
      %s71 = sphi 0, %s71
      %s73 = sphi 0, %s71
      %s74 = sphi 0, %s73
      %s88 = sphi 0, %s74
      %s92 = sphi 0, %s92
      %s94 = sphi 0, %s92
      %s95 = sphi 0, %s94
      %s109 = sphi 0, %s95
      %s113 = sphi 0, %s113
      %s115 = sphi 0, %s113
      %s116 = sphi 0, %s115
      %s130 = sphi 0, %s116
      %s134 = sphi 0, %s134
      %s136 = sphi 0, %s134
      %s137 = sphi 0, %s136
      %s151 = sphi 0, %s137
      %s155 = sphi 0, %s155
      %s157 = sphi 0, %s155
      %s158 = sphi 0, %s157
      %s172 = sphi 0, %s158
      %s178 = sphi 0, %s180
      %s181 = sphi 0, %s178
      %s182 = sphi 0, %s181
      %s198 = sphi 0, %s182
    $region4: #{_lambda_.1} parent=1 // loop_header_branch
      %19 = sbr.rel (%p17) target = $region8
    $region5: #{_lambda_.1} parent=1 // loop_body
      %s21 = ssub.s32 %s16, 1
      %s22 = ssub.s32 %s16, 2
      %s23 = sadd.s32 %s16, 1
      %s24 = ssub.s32 %s16, %s23
      %p25 = scmp.eq.s32.totalorder %s24, 0
      %s27 = sadd.s32 %s26, 1
      %s28 = scalar_select %p25, %s26, %s27
      %p31 = pneg %p25
      %p32 = scmp.eq.s32.totalorder %s16, 1
      %p33 = por %p31, %p32
      %p34 = scmp.ne.s32.totalorder %s26, %s29
      %p35 = scmp.eq.s32.totalorder %s16, 0
      %p36 = por %p34, %p35
      %p37 = scmp.ne.s32.totalorder %s26, %s29
      %p38 = scmp.eq.s32.totalorder %s21, 1
      %p39 = por %p37, %p38
      %p40 = scmp.ne.s32.totalorder %s29, %s30
      %p41 = scmp.eq.s32.totalorder %s21, 0
      %p42 = por %p40, %p41
      %p43 = scmp.ne.s32.totalorder %s29, %s30
      %p44 = scmp.eq.s32.totalorder %s22, 1
      %p45 = por %p43, %p44
      %p47 = scmp.ne.s32.totalorder %s30, %s46
      %p48 = scmp.eq.s32.totalorder %s22, 0
      %p49 = por %p47, %p48
      %s51 = sadd.s32 %s50, 1
      %p54 = scmp.eq.s32.totalorder %s16, 1
      %p55 = scmp.ne.s32.totalorder %s50, %s52
      %p56 = scmp.eq.s32.totalorder %s16, 0
      %p57 = por %p55, %p56
      %p58 = scmp.ne.s32.totalorder %s50, %s52
      %p59 = scmp.eq.s32.totalorder %s21, 1
      %p60 = por %p58, %p59
      %p61 = scmp.ne.s32.totalorder %s52, %s53
      %p62 = scmp.eq.s32.totalorder %s21, 0
      %p63 = por %p61, %p62
      %p64 = scmp.ne.s32.totalorder %s52, %s53
      %p65 = scmp.eq.s32.totalorder %s22, 1
      %p66 = por %p64, %p65
      %p68 = scmp.ne.s32.totalorder %s53, %s67
      %p69 = scmp.eq.s32.totalorder %s22, 0
      %p70 = por %p68, %p69
      %s72 = sadd.s32 %s71, 1
      %p75 = scmp.eq.s32.totalorder %s16, 1
      %p76 = scmp.ne.s32.totalorder %s71, %s73
      %p77 = scmp.eq.s32.totalorder %s16, 0
      %p78 = por %p76, %p77
      %p79 = scmp.ne.s32.totalorder %s71, %s73
      %p80 = scmp.eq.s32.totalorder %s21, 1
      %p81 = por %p79, %p80
      %p82 = scmp.ne.s32.totalorder %s73, %s74
      %p83 = scmp.eq.s32.totalorder %s21, 0
      %p84 = por %p82, %p83
      %p85 = scmp.ne.s32.totalorder %s73, %s74
      %p86 = scmp.eq.s32.totalorder %s22, 1
      %p87 = por %p85, %p86
      %p89 = scmp.ne.s32.totalorder %s74, %s88
      %p90 = scmp.eq.s32.totalorder %s22, 0
      %p91 = por %p89, %p90
      %s93 = sadd.s32 %s92, 1
      %p96 = scmp.eq.s32.totalorder %s16, 1
      %p97 = scmp.ne.s32.totalorder %s92, %s94
      %p98 = scmp.eq.s32.totalorder %s16, 0
      %p99 = por %p97, %p98
      %p100 = scmp.ne.s32.totalorder %s92, %s94
      %p101 = scmp.eq.s32.totalorder %s21, 1
      %p102 = por %p100, %p101
      %p103 = scmp.ne.s32.totalorder %s94, %s95
      %p104 = scmp.eq.s32.totalorder %s21, 0
      %p105 = por %p103, %p104
      %p106 = scmp.ne.s32.totalorder %s94, %s95
      %p107 = scmp.eq.s32.totalorder %s22, 1
      %p108 = por %p106, %p107
      %p110 = scmp.ne.s32.totalorder %s95, %s109
      %p111 = scmp.eq.s32.totalorder %s22, 0
      %p112 = por %p110, %p111
      %s114 = sadd.s32 %s113, 1
      %p117 = scmp.eq.s32.totalorder %s16, 1
      %p118 = scmp.ne.s32.totalorder %s113, %s115
      %p119 = scmp.eq.s32.totalorder %s16, 0
      %p120 = por %p118, %p119
      %p121 = scmp.ne.s32.totalorder %s113, %s115
      %p122 = scmp.eq.s32.totalorder %s21, 1
      %p123 = por %p121, %p122
      %p124 = scmp.ne.s32.totalorder %s115, %s116
      %p125 = scmp.eq.s32.totalorder %s21, 0
      %p126 = por %p124, %p125
      %p127 = scmp.ne.s32.totalorder %s115, %s116
      %p128 = scmp.eq.s32.totalorder %s22, 1
      %p129 = por %p127, %p128
      %p131 = scmp.ne.s32.totalorder %s116, %s130
      %p132 = scmp.eq.s32.totalorder %s22, 0
      %p133 = por %p131, %p132
      %s135 = sadd.s32 %s134, 1
      %p138 = scmp.eq.s32.totalorder %s16, 1
      %p139 = scmp.ne.s32.totalorder %s134, %s136
      %p140 = scmp.eq.s32.totalorder %s16, 0
      %p141 = por %p139, %p140
      %p142 = scmp.ne.s32.totalorder %s134, %s136
      %p143 = scmp.eq.s32.totalorder %s21, 1
      %p144 = por %p142, %p143
      %p145 = scmp.ne.s32.totalorder %s136, %s137
      %p146 = scmp.eq.s32.totalorder %s21, 0
      %p147 = por %p145, %p146
      %p148 = scmp.ne.s32.totalorder %s136, %s137
      %p149 = scmp.eq.s32.totalorder %s22, 1
      %p150 = por %p148, %p149
      %p152 = scmp.ne.s32.totalorder %s137, %s151
      %p153 = scmp.eq.s32.totalorder %s22, 0
      %p154 = por %p152, %p153
      %s156 = sadd.s32 %s155, 1
      %p159 = scmp.eq.s32.totalorder %s16, 1
      %p160 = scmp.ne.s32.totalorder %s155, %s157
      %p161 = scmp.eq.s32.totalorder %s16, 0
      %p162 = por %p160, %p161
      %p163 = scmp.ne.s32.totalorder %s155, %s157
      %p164 = scmp.eq.s32.totalorder %s21, 1
      %p165 = por %p163, %p164
      %p166 = scmp.ne.s32.totalorder %s157, %s158
      %p167 = scmp.eq.s32.totalorder %s21, 0
      %p168 = por %p166, %p167
      %p169 = scmp.ne.s32.totalorder %s157, %s158
      %p170 = scmp.eq.s32.totalorder %s22, 1
      %p171 = por %p169, %p170
      %p173 = scmp.ne.s32.totalorder %s158, %s172
      %p174 = scmp.eq.s32.totalorder %s22, 0
      %p175 = por %p173, %p174
      %s176 = ssub.s32 %s16, %s23
      %p177 = scmp.eq.s32.totalorder %s176, 0
      %s179 = sadd.s32 %s178, 1
      %s180 = scalar_select %p177, %s178, %s179
      %p183 = pneg %p177
      %p184 = scmp.eq.s32.totalorder %s16, 1
      %p185 = por %p183, %p184
      %p186 = scmp.ne.s32.totalorder %s178, %s181
      %p187 = scmp.eq.s32.totalorder %s16, 0
      %p188 = por %p186, %p187
      %p189 = scmp.ne.s32.totalorder %s178, %s181
      %p190 = scmp.eq.s32.totalorder %s21, 1
      %p191 = por %p189, %p190
      %p192 = scmp.ne.s32.totalorder %s181, %s182
      %p193 = scmp.eq.s32.totalorder %s21, 0
      %p194 = por %p192, %p193
      %p195 = scmp.ne.s32.totalorder %s181, %s182
      %p196 = scmp.eq.s32.totalorder %s22, 1
      %p197 = por %p195, %p196
      %p199 = scmp.ne.s32.totalorder %s182, %s198
      %p200 = scmp.eq.s32.totalorder %s22, 0
      %p201 = por %p199, %p200
      %p202 = scmp.le.s32.totalorder 1, %s16
      %p203 = scmp.lt.s32.totalorder %s16, 3
      %p204 = pnand %p202, %p203
      %p205 = pneg %p204
      // Predicated region
      $region9: #{_lambda_.1} parent=5 // pred_check
        _
      $region10: #{_lambda_.1} parent=5 // pred_check_branch
        %207 = sbr.rel (%p204) target = $region12
      $region11: #{_lambda_.1} parent=5 // pred_region
        %s208 = ssub.s32 %s16, 1
        // Predicated region
        $region13: #{_lambda_.1} parent=11 // pred_check
          %p209 = pneg %p63
        $region14: #{_lambda_.1} parent=11 // pred_check_branch
          %211 = sbr.rel (%p209) target = $region16
        $region15: #{_lambda_.1} parent=11 // pred_region
          _
        $region16: #{_lambda_.1} parent=11 // pred_fallthru
          _
        // Predicated region
        $region17: #{_lambda_.1} parent=11 // pred_check
          %p212 = pneg %p84
        $region18: #{_lambda_.1} parent=11 // pred_check_branch
          %214 = sbr.rel (%p212) target = $region20
        $region19: #{_lambda_.1} parent=11 // pred_region
          _
        $region20: #{_lambda_.1} parent=11 // pred_fallthru
          _
        // Predicated region
        $region21: #{_lambda_.1} parent=11 // pred_check
          %p215 = pneg %p105
        $region22: #{_lambda_.1} parent=11 // pred_check_branch
          %217 = sbr.rel (%p215) target = $region24
        $region23: #{_lambda_.1} parent=11 // pred_region
          _
        $region24: #{_lambda_.1} parent=11 // pred_fallthru
          _
        // Predicated region
        $region25: #{_lambda_.1} parent=11 // pred_check
          %p218 = pneg %p126
        $region26: #{_lambda_.1} parent=11 // pred_check_branch
          %220 = sbr.rel (%p218) target = $region28
        $region27: #{_lambda_.1} parent=11 // pred_region
          _
        $region28: #{_lambda_.1} parent=11 // pred_fallthru
          _
        // Predicated region
        $region29: #{_lambda_.1} parent=11 // pred_check
          %p221 = pneg %p147
        $region30: #{_lambda_.1} parent=11 // pred_check_branch
          %223 = sbr.rel (%p221) target = $region32
        $region31: #{_lambda_.1} parent=11 // pred_region
          _
        $region32: #{_lambda_.1} parent=11 // pred_fallthru
          _
        // Predicated region
        $region33: #{_lambda_.1} parent=11 // pred_check
          %p224 = pneg %p168
        $region34: #{_lambda_.1} parent=11 // pred_check_branch
          %226 = sbr.rel (%p224) target = $region36
        $region35: #{_lambda_.1} parent=11 // pred_region
          _
        $region36: #{_lambda_.1} parent=11 // pred_fallthru
          _
      $region12: #{_lambda_.1} parent=5 // pred_fallthru
        _
      %p227 = scmp.lt.s32.totalorder %s16, 2
      // Predicated region
      $region37: #{_lambda_.1} parent=5 // pred_check
        %p228 = pneg %p227
      $region38: #{_lambda_.1} parent=5 // pred_check_branch
        %230 = sbr.rel (%p228) target = $region40
      $region39: #{_lambda_.1} parent=5 // pred_region
        // Predicated region
        $region41: #{_lambda_.1} parent=39 // pred_check
          %p231 = pneg %p36
        $region42: #{_lambda_.1} parent=39 // pred_check_branch
          %233 = sbr.rel (%p231) target = $region44
        $region43: #{_lambda_.1} parent=39 // pred_region
          %p234 = scmp.lt.s32.totalorder %s16, 1
          %s235 = scalar_select %p234, %s16, 1
          %s236 = smul.addr %s235, 32
          %s237 = smul.addr %s236, 8
          %s238 = scalar_lea.vmem %s0, %s237
        $region44: #{_lambda_.1} parent=39 // pred_fallthru
          _
      $region40: #{_lambda_.1} parent=5 // pred_fallthru
        _
      %p239 = scmp.le.s32.totalorder 1, %s16
      %p240 = scmp.lt.s32.totalorder %s16, 3
      %p241 = pnand %p239, %p240
      %p242 = pneg %p241
      // Predicated region
      $region45: #{_lambda_.1} parent=5 // pred_check
        _
      $region46: #{_lambda_.1} parent=5 // pred_check_branch
        %244 = sbr.rel (%p241) target = $region48
      $region47: #{_lambda_.1} parent=5 // pred_region
        %s245 = ssub.s32 %s16, 1
        %p246 = scmp.lt.s32.totalorder %s21, 1
        %s247 = scalar_select %p246, %s21, 1
        %s248 = smul.addr %s247, 32
        %s249 = smul.addr %s248, 8
        %s250 = scalar_lea.vmem %s0, %s249
        %p251 = pneg %p42
        %p252 = pneg %p39
        %p253 = pneg %p63
        %p254 = pneg %p60
        %p255 = pneg %p84
        %p256 = pneg %p81
        %p257 = pneg %p105
        %p258 = pneg %p102
        %p259 = pneg %p126
        %p260 = pneg %p123
        %p261 = pneg %p147
        %p262 = pneg %p144
        %p263 = pneg %p168
        %p264 = pneg %p165
        %p265 = pneg %p194
        %p266 = pneg %p191
        %s267 = sand.u32 %s181, 1
        %s268 = scalar_lea.sflag [#allocation4], %s267
        %s269 = sand.u32 %s181, 1
        %s270 = smul.addr %s269, 256
        %s271 = scalar_lea.vmem [#allocation3], %s270
        %p272 = scmp.lt.s32.totalorder %s21, 1
        %s273 = scalar_select %p272, %s21, 1
        %s274 = smul.addr %s273, 32
        %s275 = smul.addr %s274, 8
        %s276 = scalar_lea.vmem %s0, %s275
        %v277 = vld [vmem:[%s276] sm:$0xff]
        %v278 = vld [vmem:[%s276 + $0x8] sm:$0xff]
        %v279 = vld [vmem:[%s276 + $0x10] sm:$0xff]
        %v280 = vld [vmem:[%s276 + $0x18] sm:$0xff]
        %v281 = vld [vmem:[%s276 + $0x20] sm:$0xff]
        %v282 = vld [vmem:[%s276 + $0x28] sm:$0xff]
        %v283 = vld [vmem:[%s276 + $0x30] sm:$0xff]
        %v284 = vld [vmem:[%s276 + $0x38] sm:$0xff]
        %v285 = vld [vmem:[%s276 + $0x40] sm:$0xff]
        %v286 = vld [vmem:[%s276 + $0x48] sm:$0xff]
        %v287 = vld [vmem:[%s276 + $0x50] sm:$0xff]
        %v288 = vld [vmem:[%s276 + $0x58] sm:$0xff]
        %v289 = vld [vmem:[%s276 + $0x60] sm:$0xff]
        %v290 = vld [vmem:[%s276 + $0x68] sm:$0xff]
        %v291 = vld [vmem:[%s276 + $0x70] sm:$0xff]
        %v292 = vld [vmem:[%s276 + $0x78] sm:$0xff]
        %v293 = vld [vmem:[%s276 + $0x80] sm:$0xff]
        %v294 = vld [vmem:[%s276 + $0x88] sm:$0xff]
        %v295 = vld [vmem:[%s276 + $0x90] sm:$0xff]
        %v296 = vld [vmem:[%s276 + $0x98] sm:$0xff]
        %v297 = vld [vmem:[%s276 + $0xa0] sm:$0xff]
        %v298 = vld [vmem:[%s276 + $0xa8] sm:$0xff]
        %v299 = vld [vmem:[%s276 + $0xb0] sm:$0xff]
        %v300 = vld [vmem:[%s276 + $0xb8] sm:$0xff]
        %v301 = vld [vmem:[%s276 + $0xc0] sm:$0xff]
        %v302 = vld [vmem:[%s276 + $0xc8] sm:$0xff]
        %v303 = vld [vmem:[%s276 + $0xd0] sm:$0xff]
        %v304 = vld [vmem:[%s276 + $0xd8] sm:$0xff]
        %v305 = vld [vmem:[%s276 + $0xe0] sm:$0xff]
        %v306 = vld [vmem:[%s276 + $0xe8] sm:$0xff]
        %v307 = vld [vmem:[%s276 + $0xf0] sm:$0xff]
        %v308 = vld [vmem:[%s276 + $0xf8] sm:$0xff]
        %vm309 = vcmask 523264
        %310 = vst.msk [vmem:[#allocation2] sm:$0xff] %vm309, 0.0
        %311 = vst.msk [vmem:[#allocation2 + $0x8] sm:$0xff] %vm309, 0.0
        %vm312 = vcmask 517120
        %313 = vst.msk [vmem:[#allocation2 + $0x10] sm:$0x3] %vm312, 0.0
        %314 = vst.msk [vmem:[#allocation2 + $0x18] sm:$0xff] %vm309, 0.0
        %315 = vst.msk [vmem:[#allocation2 + $0x20] sm:$0xff] %vm309, 0.0
        %316 = vst.msk [vmem:[#allocation2 + $0x28] sm:$0x3] %vm312, 0.0
        %317 = vst.msk [vmem:[#allocation2 + $0x30] sm:$0xff] %vm309, 0.0
        %318 = vst.msk [vmem:[#allocation2 + $0x38] sm:$0xff] %vm309, 0.0
        %319 = vst.msk [vmem:[#allocation2 + $0x40] sm:$0x3] %vm312, 0.0
        %320 = vst.msk [vmem:[#allocation2 + $0x48] sm:$0xff] %vm309, 0.0
        %321 = vst.msk [vmem:[#allocation2 + $0x50] sm:$0xff] %vm309, 0.0
        %322 = vst.msk [vmem:[#allocation2 + $0x58] sm:$0x3] %vm312, 0.0
        %323 = vst.msk [vmem:[#allocation2 + $0x60] sm:$0xff] %vm309, 0.0
        %324 = vst.msk [vmem:[#allocation2 + $0x68] sm:$0xff] %vm309, 0.0
        %325 = vst.msk [vmem:[#allocation2 + $0x70] sm:$0x3] %vm312, 0.0
        %326 = vst.msk [vmem:[#allocation2 + $0x78] sm:$0xff] %vm309, 0.0
        %327 = vst.msk [vmem:[#allocation2 + $0x80] sm:$0xff] %vm309, 0.0
        %328 = vst.msk [vmem:[#allocation2 + $0x88] sm:$0x3] %vm312, 0.0
        %329 = vst.msk [vmem:[#allocation2 + $0x90] sm:$0xff] %vm309, 0.0
        %330 = vst.msk [vmem:[#allocation2 + $0x98] sm:$0xff] %vm309, 0.0
        %331 = vst.msk [vmem:[#allocation2 + $0xa0] sm:$0x3] %vm312, 0.0
        %332 = vst.msk [vmem:[#allocation2 + $0xa8] sm:$0xff] %vm309, 0.0
        %333 = vst.msk [vmem:[#allocation2 + $0xb0] sm:$0xff] %vm309, 0.0
        %334 = vst.msk [vmem:[#allocation2 + $0xb8] sm:$0x3] %vm312, 0.0
        %335 = vst.msk [vmem:[#allocation2 + $0xc0] sm:$0xff] %vm309, 0.0
        %336 = vst.msk [vmem:[#allocation2 + $0xc8] sm:$0xff] %vm309, 0.0
        %337 = vst.msk [vmem:[#allocation2 + $0xd0] sm:$0x3] %vm312, 0.0
        %338 = vst.msk [vmem:[#allocation2 + $0xd8] sm:$0xff] %vm309, 0.0
        %339 = vst.msk [vmem:[#allocation2 + $0xe0] sm:$0xff] %vm309, 0.0
        %340 = vst.msk [vmem:[#allocation2 + $0xe8] sm:$0x3] %vm312, 0.0
        %341 = vst.msk [vmem:[#allocation2 + $0xf0] sm:$0xff] %vm309, 0.0
        %342 = vst.msk [vmem:[#allocation2 + $0xf8] sm:$0xff] %vm309, 0.0
        %343 = vst.msk [vmem:[#allocation2 + $0x100] sm:$0x3] %vm312, 0.0
        %344 = vst.msk [vmem:[#allocation2 + $0x108] sm:$0xff] %vm309, 0.0
        %345 = vst.msk [vmem:[#allocation2 + $0x110] sm:$0xff] %vm309, 0.0
        %346 = vst.msk [vmem:[#allocation2 + $0x118] sm:$0x3] %vm312, 0.0
        %347 = vst.msk [vmem:[#allocation2 + $0x120] sm:$0xff] %vm309, 0.0
        %348 = vst.msk [vmem:[#allocation2 + $0x128] sm:$0xff] %vm309, 0.0
        %349 = vst.msk [vmem:[#allocation2 + $0x130] sm:$0x3] %vm312, 0.0
        %350 = vst.msk [vmem:[#allocation2 + $0x138] sm:$0xff] %vm309, 0.0
        %351 = vst.msk [vmem:[#allocation2 + $0x140] sm:$0xff] %vm309, 0.0
        %352 = vst.msk [vmem:[#allocation2 + $0x148] sm:$0x3] %vm312, 0.0
        %353 = vst.msk [vmem:[#allocation2 + $0x150] sm:$0xff] %vm309, 0.0
        %354 = vst.msk [vmem:[#allocation2 + $0x158] sm:$0xff] %vm309, 0.0
        %355 = vst.msk [vmem:[#allocation2 + $0x160] sm:$0x3] %vm312, 0.0
        %356 = vst.msk [vmem:[#allocation2 + $0x168] sm:$0xff] %vm309, 0.0
        %357 = vst.msk [vmem:[#allocation2 + $0x170] sm:$0xff] %vm309, 0.0
        %358 = vst.msk [vmem:[#allocation2 + $0x178] sm:$0x3] %vm312, 0.0
        %359 = vst.msk [vmem:[#allocation2 + $0x180] sm:$0xff] %vm309, 0.0
        %360 = vst.msk [vmem:[#allocation2 + $0x188] sm:$0xff] %vm309, 0.0
        %361 = vst.msk [vmem:[#allocation2 + $0x190] sm:$0x3] %vm312, 0.0
        %362 = vst.msk [vmem:[#allocation2 + $0x198] sm:$0xff] %vm309, 0.0
        %363 = vst.msk [vmem:[#allocation2 + $0x1a0] sm:$0xff] %vm309, 0.0
        %364 = vst.msk [vmem:[#allocation2 + $0x1a8] sm:$0x3] %vm312, 0.0
        %v365 = vld [vmem:[%s1] sm:$0x1]
        %v367 = vlaneseq
        %v368 = vshrl.u32 %v367, 7
        %v369 = vsub.s32 0, %v368
        %v370 = vrot.slane %v365, %v369
        %v372 = vmul.f32 %v277, %v370
        %v373 = vmul.f32 %v278, %v370
        %v374 = vmul.f32 %v279, %v370
        %v375 = vmul.f32 %v280, %v370
        %v376 = vmul.f32 %v281, %v370
        %v377 = vmul.f32 %v282, %v370
        %v378 = vmul.f32 %v283, %v370
        %v379 = vmul.f32 %v284, %v370
        %v380 = vmul.f32 %v285, %v370
        %v381 = vmul.f32 %v286, %v370
        %v382 = vmul.f32 %v287, %v370
        %v383 = vmul.f32 %v288, %v370
        %v384 = vmul.f32 %v289, %v370
        %v385 = vmul.f32 %v290, %v370
        %v386 = vmul.f32 %v291, %v370
        %v387 = vmul.f32 %v292, %v370
        %v388 = vmul.f32 %v293, %v370
        %v389 = vmul.f32 %v294, %v370
        %v390 = vmul.f32 %v295, %v370
        %v391 = vmul.f32 %v296, %v370
        %v392 = vmul.f32 %v297, %v370
        %v393 = vmul.f32 %v298, %v370
        %v394 = vmul.f32 %v299, %v370
        %v395 = vmul.f32 %v300, %v370
        %v396 = vmul.f32 %v301, %v370
        %v397 = vmul.f32 %v302, %v370
        %v398 = vmul.f32 %v303, %v370
        %v399 = vmul.f32 %v304, %v370
        %v400 = vmul.f32 %v305, %v370
        %v401 = vmul.f32 %v306, %v370
        %v402 = vmul.f32 %v307, %v370
        %v403 = vmul.f32 %v308, %v370
        %v404 = vld [vmem:[%s2] sm:$0x1]
        %v406 = vlaneseq
        %v407 = vshrl.u32 %v406, 7
        %v408 = vsub.s32 0, %v407
        %v409 = vrot.slane %v404, %v408
        %v411 = vadd.f32 %v372, %v409
        %v412 = vadd.f32 %v373, %v409
        %v413 = vadd.f32 %v374, %v409
        %v414 = vadd.f32 %v375, %v409
        %v415 = vadd.f32 %v376, %v409
        %v416 = vadd.f32 %v377, %v409
        %v417 = vadd.f32 %v378, %v409
        %v418 = vadd.f32 %v379, %v409
        %v419 = vadd.f32 %v380, %v409
        %v420 = vadd.f32 %v381, %v409
        %v421 = vadd.f32 %v382, %v409
        %v422 = vadd.f32 %v383, %v409
        %v423 = vadd.f32 %v384, %v409
        %v424 = vadd.f32 %v385, %v409
        %v425 = vadd.f32 %v386, %v409
        %v426 = vadd.f32 %v387, %v409
        %v427 = vadd.f32 %v388, %v409
        %v428 = vadd.f32 %v389, %v409
        %v429 = vadd.f32 %v390, %v409
        %v430 = vadd.f32 %v391, %v409
        %v431 = vadd.f32 %v392, %v409
        %v432 = vadd.f32 %v393, %v409
        %v433 = vadd.f32 %v394, %v409
        %v434 = vadd.f32 %v395, %v409
        %v435 = vadd.f32 %v396, %v409
        %v436 = vadd.f32 %v397, %v409
        %v437 = vadd.f32 %v398, %v409
        %v438 = vadd.f32 %v399, %v409
        %v439 = vadd.f32 %v400, %v409
        %v440 = vadd.f32 %v401, %v409
        %v441 = vadd.f32 %v402, %v409
        %v442 = vadd.f32 %v403, %v409
        %v443 = vmax.f32 %v411, 0.0
        %v444 = vmax.f32 %v412, 0.0
        %v445 = vmax.f32 %v413, 0.0
        %v446 = vmax.f32 %v414, 0.0
        %v447 = vmax.f32 %v415, 0.0
        %v448 = vmax.f32 %v416, 0.0
        %v449 = vmax.f32 %v417, 0.0
        %v450 = vmax.f32 %v418, 0.0
        %v451 = vmax.f32 %v419, 0.0
        %v452 = vmax.f32 %v420, 0.0
        %v453 = vmax.f32 %v421, 0.0
        %v454 = vmax.f32 %v422, 0.0
        %v455 = vmax.f32 %v423, 0.0
        %v456 = vmax.f32 %v424, 0.0
        %v457 = vmax.f32 %v425, 0.0
        %v458 = vmax.f32 %v426, 0.0
        %v459 = vmax.f32 %v427, 0.0
        %v460 = vmax.f32 %v428, 0.0
        %v461 = vmax.f32 %v429, 0.0
        %v462 = vmax.f32 %v430, 0.0
        %v463 = vmax.f32 %v431, 0.0
        %v464 = vmax.f32 %v432, 0.0
        %v465 = vmax.f32 %v433, 0.0
        %v466 = vmax.f32 %v434, 0.0
        %v467 = vmax.f32 %v435, 0.0
        %v468 = vmax.f32 %v436, 0.0
        %v469 = vmax.f32 %v437, 0.0
        %v470 = vmax.f32 %v438, 0.0
        %v471 = vmax.f32 %v439, 0.0
        %v472 = vmax.f32 %v440, 0.0
        %v473 = vmax.f32 %v441, 0.0
        %v474 = vmax.f32 %v442, 0.0
        %s475 = scalar_lea.vmem [#allocation2], 24
        %476 = vst.msk [vmem:[%s475 + $0x1] sm:$0xff] %vm309, %v443
        %477 = vst.msk [vmem:[%s475 + $0x9] sm:$0xff] %vm309, %v444
        %478 = vst.msk [vmem:[%s475 + $0x19] sm:$0xff] %vm309, %v445
        %479 = vst.msk [vmem:[%s475 + $0x21] sm:$0xff] %vm309, %v446
        %480 = vst.msk [vmem:[%s475 + $0x31] sm:$0xff] %vm309, %v447
        %481 = vst.msk [vmem:[%s475 + $0x39] sm:$0xff] %vm309, %v448
        %482 = vst.msk [vmem:[%s475 + $0x49] sm:$0xff] %vm309, %v449
        %483 = vst.msk [vmem:[%s475 + $0x51] sm:$0xff] %vm309, %v450
        %484 = vst.msk [vmem:[%s475 + $0x61] sm:$0xff] %vm309, %v451
        %485 = vst.msk [vmem:[%s475 + $0x69] sm:$0xff] %vm309, %v452
        %486 = vst.msk [vmem:[%s475 + $0x79] sm:$0xff] %vm309, %v453
        %487 = vst.msk [vmem:[%s475 + $0x81] sm:$0xff] %vm309, %v454
        %488 = vst.msk [vmem:[%s475 + $0x91] sm:$0xff] %vm309, %v455
        %489 = vst.msk [vmem:[%s475 + $0x99] sm:$0xff] %vm309, %v456
        %490 = vst.msk [vmem:[%s475 + $0xa9] sm:$0xff] %vm309, %v457
        %491 = vst.msk [vmem:[%s475 + $0xb1] sm:$0xff] %vm309, %v458
        %492 = vst.msk [vmem:[%s475 + $0xc1] sm:$0xff] %vm309, %v459
        %493 = vst.msk [vmem:[%s475 + $0xc9] sm:$0xff] %vm309, %v460
        %494 = vst.msk [vmem:[%s475 + $0xd9] sm:$0xff] %vm309, %v461
        %495 = vst.msk [vmem:[%s475 + $0xe1] sm:$0xff] %vm309, %v462
        %496 = vst.msk [vmem:[%s475 + $0xf1] sm:$0xff] %vm309, %v463
        %497 = vst.msk [vmem:[%s475 + $0xf9] sm:$0xff] %vm309, %v464
        %498 = vst.msk [vmem:[%s475 + $0x109] sm:$0xff] %vm309, %v465
        %499 = vst.msk [vmem:[%s475 + $0x111] sm:$0xff] %vm309, %v466
        %500 = vst.msk [vmem:[%s475 + $0x121] sm:$0xff] %vm309, %v467
        %501 = vst.msk [vmem:[%s475 + $0x129] sm:$0xff] %vm309, %v468
        %502 = vst.msk [vmem:[%s475 + $0x139] sm:$0xff] %vm309, %v469
        %503 = vst.msk [vmem:[%s475 + $0x141] sm:$0xff] %vm309, %v470
        %504 = vst.msk [vmem:[%s475 + $0x151] sm:$0xff] %vm309, %v471
        %505 = vst.msk [vmem:[%s475 + $0x159] sm:$0xff] %vm309, %v472
        %506 = vst.msk [vmem:[%s475 + $0x169] sm:$0xff] %vm309, %v473
        %507 = vst.msk [vmem:[%s475 + $0x171] sm:$0xff] %vm309, %v474
        %v508 = vld [vmem:[#allocation2] sm:$0xff]
        %v509 = vld [vmem:[#allocation2 + $0x8] sm:$0xff]
        %v510 = vld [vmem:[#allocation2 + $0x18] sm:$0xff]
        %v511 = vld [vmem:[#allocation2 + $0x20] sm:$0xff]
        %v512 = vld [vmem:[#allocation2 + $0x30] sm:$0xff]
        %v513 = vld [vmem:[#allocation2 + $0x38] sm:$0xff]
        %v514 = vld [vmem:[#allocation2 + $0x48] sm:$0xff]
        %v515 = vld [vmem:[#allocation2 + $0x50] sm:$0xff]
        %v516 = vld [vmem:[#allocation2 + $0x60] sm:$0xff]
        %v517 = vld [vmem:[#allocation2 + $0x68] sm:$0xff]
        %v518 = vld [vmem:[#allocation2 + $0x78] sm:$0xff]
        %v519 = vld [vmem:[#allocation2 + $0x80] sm:$0xff]
        %v520 = vld [vmem:[#allocation2 + $0x90] sm:$0xff]
        %v521 = vld [vmem:[#allocation2 + $0x98] sm:$0xff]
        %v522 = vld [vmem:[#allocation2 + $0xa8] sm:$0xff]
        %v523 = vld [vmem:[#allocation2 + $0xb0] sm:$0xff]
        %v524 = vld [vmem:[#allocation2 + $0xc0] sm:$0xff]
        %v525 = vld [vmem:[#allocation2 + $0xc8] sm:$0xff]
        %v526 = vld [vmem:[#allocation2 + $0xd8] sm:$0xff]
        %v527 = vld [vmem:[#allocation2 + $0xe0] sm:$0xff]
        %v528 = vld [vmem:[#allocation2 + $0xf0] sm:$0xff]
        %v529 = vld [vmem:[#allocation2 + $0xf8] sm:$0xff]
        %v530 = vld [vmem:[#allocation2 + $0x108] sm:$0xff]
        %v531 = vld [vmem:[#allocation2 + $0x110] sm:$0xff]
        %v532 = vld [vmem:[#allocation2 + $0x120] sm:$0xff]
        %v533 = vld [vmem:[#allocation2 + $0x128] sm:$0xff]
        %v534 = vld [vmem:[#allocation2 + $0x138] sm:$0xff]
        %v535 = vld [vmem:[#allocation2 + $0x140] sm:$0xff]
        %v536 = vld [vmem:[#allocation2 + $0x150] sm:$0xff]
        %v537 = vld [vmem:[#allocation2 + $0x158] sm:$0xff]
        %v538 = vld [vmem:[#allocation2 + $0x168] sm:$0xff]
        %v539 = vld [vmem:[#allocation2 + $0x170] sm:$0xff]
        %v540 = vld [vmem:[#allocation2 + $0x1] sm:$0xff]
        %v541 = vld [vmem:[#allocation2 + $0x9] sm:$0xff]
        %v542 = vld [vmem:[#allocation2 + $0x19] sm:$0xff]
        %v543 = vld [vmem:[#allocation2 + $0x21] sm:$0xff]
        %v544 = vld [vmem:[#allocation2 + $0x31] sm:$0xff]
        %v545 = vld [vmem:[#allocation2 + $0x39] sm:$0xff]
        %v546 = vld [vmem:[#allocation2 + $0x49] sm:$0xff]
        %v547 = vld [vmem:[#allocation2 + $0x51] sm:$0xff]
        %v548 = vld [vmem:[#allocation2 + $0x61] sm:$0xff]
        %v549 = vld [vmem:[#allocation2 + $0x69] sm:$0xff]
        %v550 = vld [vmem:[#allocation2 + $0x79] sm:$0xff]
        %v551 = vld [vmem:[#allocation2 + $0x81] sm:$0xff]
        %v552 = vld [vmem:[#allocation2 + $0x91] sm:$0xff]
        %v553 = vld [vmem:[#allocation2 + $0x99] sm:$0xff]
        %v554 = vld [vmem:[#allocation2 + $0xa9] sm:$0xff]
        %v555 = vld [vmem:[#allocation2 + $0xb1] sm:$0xff]
        %v556 = vld [vmem:[#allocation2 + $0xc1] sm:$0xff]
        %v557 = vld [vmem:[#allocation2 + $0xc9] sm:$0xff]
        %v558 = vld [vmem:[#allocation2 + $0xd9] sm:$0xff]
        %v559 = vld [vmem:[#allocation2 + $0xe1] sm:$0xff]
        %v560 = vld [vmem:[#allocation2 + $0xf1] sm:$0xff]
        %v561 = vld [vmem:[#allocation2 + $0xf9] sm:$0xff]
        %v562 = vld [vmem:[#allocation2 + $0x109] sm:$0xff]
        %v563 = vld [vmem:[#allocation2 + $0x111] sm:$0xff]
        %v564 = vld [vmem:[#allocation2 + $0x121] sm:$0xff]
        %v565 = vld [vmem:[#allocation2 + $0x129] sm:$0xff]
        %v566 = vld [vmem:[#allocation2 + $0x139] sm:$0xff]
        %v567 = vld [vmem:[#allocation2 + $0x141] sm:$0xff]
        %v568 = vld [vmem:[#allocation2 + $0x151] sm:$0xff]
        %v569 = vld [vmem:[#allocation2 + $0x159] sm:$0xff]
        %v570 = vld [vmem:[#allocation2 + $0x169] sm:$0xff]
        %v571 = vld [vmem:[#allocation2 + $0x171] sm:$0xff]
        %v572 = vld [vmem:[#allocation2 + $0x2] sm:$0xff]
        %v573 = vld [vmem:[#allocation2 + $0xa] sm:$0xff]
        %v574 = vld [vmem:[#allocation2 + $0x1a] sm:$0xff]
        %v575 = vld [vmem:[#allocation2 + $0x22] sm:$0xff]
        %v576 = vld [vmem:[#allocation2 + $0x32] sm:$0xff]
        %v577 = vld [vmem:[#allocation2 + $0x3a] sm:$0xff]
        %v578 = vld [vmem:[#allocation2 + $0x4a] sm:$0xff]
        %v579 = vld [vmem:[#allocation2 + $0x52] sm:$0xff]
        %v580 = vld [vmem:[#allocation2 + $0x62] sm:$0xff]
        %v581 = vld [vmem:[#allocation2 + $0x6a] sm:$0xff]
        %v582 = vld [vmem:[#allocation2 + $0x7a] sm:$0xff]
        %v583 = vld [vmem:[#allocation2 + $0x82] sm:$0xff]
        %v584 = vld [vmem:[#allocation2 + $0x92] sm:$0xff]
        %v585 = vld [vmem:[#allocation2 + $0x9a] sm:$0xff]
        %v586 = vld [vmem:[#allocation2 + $0xaa] sm:$0xff]
        %v587 = vld [vmem:[#allocation2 + $0xb2] sm:$0xff]
        %v588 = vld [vmem:[#allocation2 + $0xc2] sm:$0xff]
        %v589 = vld [vmem:[#allocation2 + $0xca] sm:$0xff]
        %v590 = vld [vmem:[#allocation2 + $0xda] sm:$0xff]
        %v591 = vld [vmem:[#allocation2 + $0xe2] sm:$0xff]
        %v592 = vld [vmem:[#allocation2 + $0xf2] sm:$0xff]
        %v593 = vld [vmem:[#allocation2 + $0xfa] sm:$0xff]
        %v594 = vld [vmem:[#allocation2 + $0x10a] sm:$0xff]
        %v595 = vld [vmem:[#allocation2 + $0x112] sm:$0xff]
        %v596 = vld [vmem:[#allocation2 + $0x122] sm:$0xff]
        %v597 = vld [vmem:[#allocation2 + $0x12a] sm:$0xff]
        %v598 = vld [vmem:[#allocation2 + $0x13a] sm:$0xff]
        %v599 = vld [vmem:[#allocation2 + $0x142] sm:$0xff]
        %v600 = vld [vmem:[#allocation2 + $0x152] sm:$0xff]
        %v601 = vld [vmem:[#allocation2 + $0x15a] sm:$0xff]
        %v602 = vld [vmem:[#allocation2 + $0x16a] sm:$0xff]
        %v603 = vld [vmem:[#allocation2 + $0x172] sm:$0xff]
        %v604 = vld [vmem:[%s475] sm:$0xff]
        %v605 = vld [vmem:[%s475 + $0x8] sm:$0xff]
        %v606 = vld [vmem:[%s475 + $0x18] sm:$0xff]
        %v607 = vld [vmem:[%s475 + $0x20] sm:$0xff]
        %v608 = vld [vmem:[%s475 + $0x30] sm:$0xff]
        %v609 = vld [vmem:[%s475 + $0x38] sm:$0xff]
        %v610 = vld [vmem:[%s475 + $0x48] sm:$0xff]
        %v611 = vld [vmem:[%s475 + $0x50] sm:$0xff]
        %v612 = vld [vmem:[%s475 + $0x60] sm:$0xff]
        %v613 = vld [vmem:[%s475 + $0x68] sm:$0xff]
        %v614 = vld [vmem:[%s475 + $0x78] sm:$0xff]
        %v615 = vld [vmem:[%s475 + $0x80] sm:$0xff]
        %v616 = vld [vmem:[%s475 + $0x90] sm:$0xff]
        %v617 = vld [vmem:[%s475 + $0x98] sm:$0xff]
        %v618 = vld [vmem:[%s475 + $0xa8] sm:$0xff]
        %v619 = vld [vmem:[%s475 + $0xb0] sm:$0xff]
        %v620 = vld [vmem:[%s475 + $0xc0] sm:$0xff]
        %v621 = vld [vmem:[%s475 + $0xc8] sm:$0xff]
        %v622 = vld [vmem:[%s475 + $0xd8] sm:$0xff]
        %v623 = vld [vmem:[%s475 + $0xe0] sm:$0xff]
        %v624 = vld [vmem:[%s475 + $0xf0] sm:$0xff]
        %v625 = vld [vmem:[%s475 + $0xf8] sm:$0xff]
        %v626 = vld [vmem:[%s475 + $0x108] sm:$0xff]
        %v627 = vld [vmem:[%s475 + $0x110] sm:$0xff]
        %v628 = vld [vmem:[%s475 + $0x120] sm:$0xff]
        %v629 = vld [vmem:[%s475 + $0x128] sm:$0xff]
        %v630 = vld [vmem:[%s475 + $0x138] sm:$0xff]
        %v631 = vld [vmem:[%s475 + $0x140] sm:$0xff]
        %v632 = vld [vmem:[%s475 + $0x150] sm:$0xff]
        %v633 = vld [vmem:[%s475 + $0x158] sm:$0xff]
        %v634 = vld [vmem:[%s475 + $0x168] sm:$0xff]
        %v635 = vld [vmem:[%s475 + $0x170] sm:$0xff]
        %668 = vrot.lane.b32.xlu0 %v540, 64
        %v669 = vpop.permute.xlu0 %668
        %670 = vrot.lane.b32.xlu0 %v541, 64
        %v671 = vpop.permute.xlu0 %670
        %672 = vrot.lane.b32.xlu0 %v542, 64
        %v673 = vpop.permute.xlu0 %672
        %674 = vrot.lane.b32.xlu0 %v543, 64
        %v675 = vpop.permute.xlu0 %674
        %676 = vrot.lane.b32.xlu0 %v544, 64
        %v677 = vpop.permute.xlu0 %676
        %678 = vrot.lane.b32.xlu0 %v545, 64
        %v679 = vpop.permute.xlu0 %678
        %680 = vrot.lane.b32.xlu0 %v546, 64
        %v681 = vpop.permute.xlu0 %680
        %682 = vrot.lane.b32.xlu0 %v547, 64
        %v683 = vpop.permute.xlu0 %682
        %684 = vrot.lane.b32.xlu0 %v548, 64
        %v685 = vpop.permute.xlu0 %684
        %686 = vrot.lane.b32.xlu0 %v549, 64
        %v687 = vpop.permute.xlu0 %686
        %688 = vrot.lane.b32.xlu0 %v550, 64
        %v689 = vpop.permute.xlu0 %688
        %690 = vrot.lane.b32.xlu0 %v551, 64
        %v691 = vpop.permute.xlu0 %690
        %692 = vrot.lane.b32.xlu0 %v552, 64
        %v693 = vpop.permute.xlu0 %692
        %694 = vrot.lane.b32.xlu0 %v553, 64
        %v695 = vpop.permute.xlu0 %694
        %696 = vrot.lane.b32.xlu0 %v554, 64
        %v697 = vpop.permute.xlu0 %696
        %698 = vrot.lane.b32.xlu0 %v555, 64
        %v699 = vpop.permute.xlu0 %698
        %700 = vrot.lane.b32.xlu0 %v556, 64
        %v701 = vpop.permute.xlu0 %700
        %702 = vrot.lane.b32.xlu0 %v557, 64
        %v703 = vpop.permute.xlu0 %702
        %704 = vrot.lane.b32.xlu0 %v558, 64
        %v705 = vpop.permute.xlu0 %704
        %706 = vrot.lane.b32.xlu0 %v559, 64
        %v707 = vpop.permute.xlu0 %706
        %708 = vrot.lane.b32.xlu0 %v560, 64
        %v709 = vpop.permute.xlu0 %708
        %710 = vrot.lane.b32.xlu0 %v561, 64
        %v711 = vpop.permute.xlu0 %710
        %712 = vrot.lane.b32.xlu0 %v562, 64
        %v713 = vpop.permute.xlu0 %712
        %714 = vrot.lane.b32.xlu0 %v563, 64
        %v715 = vpop.permute.xlu0 %714
        %716 = vrot.lane.b32.xlu0 %v564, 64
        %v717 = vpop.permute.xlu0 %716
        %718 = vrot.lane.b32.xlu0 %v565, 64
        %v719 = vpop.permute.xlu0 %718
        %720 = vrot.lane.b32.xlu0 %v566, 64
        %v721 = vpop.permute.xlu0 %720
        %722 = vrot.lane.b32.xlu0 %v567, 64
        %v723 = vpop.permute.xlu0 %722
        %724 = vrot.lane.b32.xlu0 %v568, 64
        %v725 = vpop.permute.xlu0 %724
        %726 = vrot.lane.b32.xlu0 %v569, 64
        %v727 = vpop.permute.xlu0 %726
        %728 = vrot.lane.b32.xlu0 %v570, 64
        %v729 = vpop.permute.xlu0 %728
        %730 = vrot.lane.b32.xlu0 %v571, 64
        %v731 = vpop.permute.xlu0 %730
        %796 = vrot.lane.b32.xlu0 %v604, 64
        %v797 = vpop.permute.xlu0 %796
        %798 = vrot.lane.b32.xlu0 %v605, 64
        %v799 = vpop.permute.xlu0 %798
        %800 = vrot.lane.b32.xlu0 %v606, 64
        %v801 = vpop.permute.xlu0 %800
        %802 = vrot.lane.b32.xlu0 %v607, 64
        %v803 = vpop.permute.xlu0 %802
        %804 = vrot.lane.b32.xlu0 %v608, 64
        %v805 = vpop.permute.xlu0 %804
        %806 = vrot.lane.b32.xlu0 %v609, 64
        %v807 = vpop.permute.xlu0 %806
        %808 = vrot.lane.b32.xlu0 %v610, 64
        %v809 = vpop.permute.xlu0 %808
        %810 = vrot.lane.b32.xlu0 %v611, 64
        %v811 = vpop.permute.xlu0 %810
        %812 = vrot.lane.b32.xlu0 %v612, 64
        %v813 = vpop.permute.xlu0 %812
        %814 = vrot.lane.b32.xlu0 %v613, 64
        %v815 = vpop.permute.xlu0 %814
        %816 = vrot.lane.b32.xlu0 %v614, 64
        %v817 = vpop.permute.xlu0 %816
        %818 = vrot.lane.b32.xlu0 %v615, 64
        %v819 = vpop.permute.xlu0 %818
        %820 = vrot.lane.b32.xlu0 %v616, 64
        %v821 = vpop.permute.xlu0 %820
        %822 = vrot.lane.b32.xlu0 %v617, 64
        %v823 = vpop.permute.xlu0 %822
        %824 = vrot.lane.b32.xlu0 %v618, 64
        %v825 = vpop.permute.xlu0 %824
        %826 = vrot.lane.b32.xlu0 %v619, 64
        %v827 = vpop.permute.xlu0 %826
        %828 = vrot.lane.b32.xlu0 %v620, 64
        %v829 = vpop.permute.xlu0 %828
        %830 = vrot.lane.b32.xlu0 %v621, 64
        %v831 = vpop.permute.xlu0 %830
        %832 = vrot.lane.b32.xlu0 %v622, 64
        %v833 = vpop.permute.xlu0 %832
        %834 = vrot.lane.b32.xlu0 %v623, 64
        %v835 = vpop.permute.xlu0 %834
        %836 = vrot.lane.b32.xlu0 %v624, 64
        %v837 = vpop.permute.xlu0 %836
        %838 = vrot.lane.b32.xlu0 %v625, 64
        %v839 = vpop.permute.xlu0 %838
        %840 = vrot.lane.b32.xlu0 %v626, 64
        %v841 = vpop.permute.xlu0 %840
        %842 = vrot.lane.b32.xlu0 %v627, 64
        %v843 = vpop.permute.xlu0 %842
        %844 = vrot.lane.b32.xlu0 %v628, 64
        %v845 = vpop.permute.xlu0 %844
        %846 = vrot.lane.b32.xlu0 %v629, 64
        %v847 = vpop.permute.xlu0 %846
        %848 = vrot.lane.b32.xlu0 %v630, 64
        %v849 = vpop.permute.xlu0 %848
        %850 = vrot.lane.b32.xlu0 %v631, 64
        %v851 = vpop.permute.xlu0 %850
        %852 = vrot.lane.b32.xlu0 %v632, 64
        %v853 = vpop.permute.xlu0 %852
        %854 = vrot.lane.b32.xlu0 %v633, 64
        %v855 = vpop.permute.xlu0 %854
        %856 = vrot.lane.b32.xlu0 %v634, 64
        %v857 = vpop.permute.xlu0 %856
        %858 = vrot.lane.b32.xlu0 %v635, 64
        %v859 = vpop.permute.xlu0 %858
        %v892 = vsel %vm309, %v508, %v669
        %v893 = vsel %vm309, %v509, %v671
        %v894 = vsel %vm309, %v510, %v673
        %v895 = vsel %vm309, %v511, %v675
        %v896 = vsel %vm309, %v512, %v677
        %v897 = vsel %vm309, %v513, %v679
        %v898 = vsel %vm309, %v514, %v681
        %v899 = vsel %vm309, %v515, %v683
        %v900 = vsel %vm309, %v516, %v685
        %v901 = vsel %vm309, %v517, %v687
        %v902 = vsel %vm309, %v518, %v689
        %v903 = vsel %vm309, %v519, %v691
        %v904 = vsel %vm309, %v520, %v693
        %v905 = vsel %vm309, %v521, %v695
        %v906 = vsel %vm309, %v522, %v697
        %v907 = vsel %vm309, %v523, %v699
        %v908 = vsel %vm309, %v524, %v701
        %v909 = vsel %vm309, %v525, %v703
        %v910 = vsel %vm309, %v526, %v705
        %v911 = vsel %vm309, %v527, %v707
        %v912 = vsel %vm309, %v528, %v709
        %v913 = vsel %vm309, %v529, %v711
        %v914 = vsel %vm309, %v530, %v713
        %v915 = vsel %vm309, %v531, %v715
        %v916 = vsel %vm309, %v532, %v717
        %v917 = vsel %vm309, %v533, %v719
        %v918 = vsel %vm309, %v534, %v721
        %v919 = vsel %vm309, %v535, %v723
        %v920 = vsel %vm309, %v536, %v725
        %v921 = vsel %vm309, %v537, %v727
        %v922 = vsel %vm309, %v538, %v729
        %v923 = vsel %vm309, %v539, %v731
        %v924 = vsel %vm309, %v572, %v797
        %v925 = vsel %vm309, %v573, %v799
        %v926 = vsel %vm309, %v574, %v801
        %v927 = vsel %vm309, %v575, %v803
        %v928 = vsel %vm309, %v576, %v805
        %v929 = vsel %vm309, %v577, %v807
        %v930 = vsel %vm309, %v578, %v809
        %v931 = vsel %vm309, %v579, %v811
        %v932 = vsel %vm309, %v580, %v813
        %v933 = vsel %vm309, %v581, %v815
        %v934 = vsel %vm309, %v582, %v817
        %v935 = vsel %vm309, %v583, %v819
        %v936 = vsel %vm309, %v584, %v821
        %v937 = vsel %vm309, %v585, %v823
        %v938 = vsel %vm309, %v586, %v825
        %v939 = vsel %vm309, %v587, %v827
        %v940 = vsel %vm309, %v588, %v829
        %v941 = vsel %vm309, %v589, %v831
        %v942 = vsel %vm309, %v590, %v833
        %v943 = vsel %vm309, %v591, %v835
        %v944 = vsel %vm309, %v592, %v837
        %v945 = vsel %vm309, %v593, %v839
        %v946 = vsel %vm309, %v594, %v841
        %v947 = vsel %vm309, %v595, %v843
        %v948 = vsel %vm309, %v596, %v845
        %v949 = vsel %vm309, %v597, %v847
        %v950 = vsel %vm309, %v598, %v849
        %v951 = vsel %vm309, %v599, %v851
        %v952 = vsel %vm309, %v600, %v853
        %v953 = vsel %vm309, %v601, %v855
        %v954 = vsel %vm309, %v602, %v857
        %v955 = vsel %vm309, %v603, %v859
        %v956 = vld [vmem:[%s3] sm:$0xff]
        %v957 = vld [vmem:[%s3 + $0x8] sm:$0xff]
        %v958 = vld [vmem:[%s3 + $0x10] sm:$0xff]
        %v959 = vld [vmem:[%s3 + $0x18] sm:$0xff]
        %v960 = vld [vmem:[%s3 + $0x20] sm:$0xff]
        %v961 = vld [vmem:[%s3 + $0x28] sm:$0xff]
        %v962 = vld [vmem:[%s3 + $0x30] sm:$0xff]
        %v963 = vld [vmem:[%s3 + $0x38] sm:$0xff]
        %v964 = vld [vmem:[%s3 + $0x40] sm:$0xff]
        %v965 = vld [vmem:[%s3 + $0x48] sm:$0xff]
        %v966 = vld [vmem:[%s3 + $0x50] sm:$0xff]
        %v967 = vld [vmem:[%s3 + $0x58] sm:$0xff]
        %v968 = vld [vmem:[%s3 + $0x60] sm:$0xff]
        %v969 = vld [vmem:[%s3 + $0x68] sm:$0xff]
        %v970 = vld [vmem:[%s3 + $0x70] sm:$0xff]
        %v971 = vld [vmem:[%s3 + $0x78] sm:$0xff]
        %v972 = vld [vmem:[%s3 + $0x80] sm:$0xff]
        %v973 = vld [vmem:[%s3 + $0x88] sm:$0xff]
        %v974 = vld [vmem:[%s3 + $0x90] sm:$0xff]
        %v975 = vld [vmem:[%s3 + $0x98] sm:$0xff]
        %v976 = vld [vmem:[%s3 + $0xa0] sm:$0xff]
        %v977 = vld [vmem:[%s3 + $0xa8] sm:$0xff]
        %v978 = vld [vmem:[%s3 + $0xb0] sm:$0xff]
        %v979 = vld [vmem:[%s3 + $0xb8] sm:$0xff]
        %v980 = vld [vmem:[%s3 + $0xc0] sm:$0xff]
        %v981 = vld [vmem:[%s3 + $0xc8] sm:$0xff]
        %v982 = vld [vmem:[%s3 + $0xd0] sm:$0xff]
        %v983 = vld [vmem:[%s3 + $0xd8] sm:$0xff]
        %v984 = vld [vmem:[%s3 + $0xe0] sm:$0xff]
        %v985 = vld [vmem:[%s3 + $0xe8] sm:$0xff]
        %v986 = vld [vmem:[%s3 + $0xf0] sm:$0xff]
        %v987 = vld [vmem:[%s3 + $0xf8] sm:$0xff]
        %v988 = vld [vmem:[%s4] sm:$0x1]
        %v990 = vlaneseq
        %v991 = vshrl.u32 %v990, 7
        %v992 = vsub.s32 0, %v991
        %v993 = vrot.slane %v988, %v992
        %995 = vmatprep.subr.mxu0 0.0
        %996 = vmatpush1.msra.mxu0 %v956
        %997 = vmatprep.subr.mxu0 0.0
        %998 = vmatpush1.msra.mxu0 %v957
        %999 = vmatprep.subr.mxu0 0.0
        %1000 = vmatpush1.msra.mxu0 %v958
        %1001 = vmatprep.subr.mxu0 0.0
        %1002 = vmatpush1.msra.mxu0 %v959
        %1003 = vmatprep.subr.mxu0 0.0
        %1004 = vmatpush1.msra.mxu0 %v960
        %1005 = vmatprep.subr.mxu0 0.0
        %1006 = vmatpush1.msra.mxu0 %v961
        %1007 = vmatprep.subr.mxu0 0.0
        %1008 = vmatpush1.msra.mxu0 %v962
        %1009 = vmatprep.subr.mxu0 0.0
        %1010 = vmatpush1.msra.mxu0 %v963
        %1011 = vmatprep.subr.mxu0 0.0
        %1012 = vmatpush1.msra.mxu0 %v964
        %1013 = vmatprep.subr.mxu0 0.0
        %1014 = vmatpush1.msra.mxu0 %v965
        %1015 = vmatprep.subr.mxu0 0.0
        %1016 = vmatpush1.msra.mxu0 %v966
        %1017 = vmatprep.subr.mxu0 0.0
        %1018 = vmatpush1.msra.mxu0 %v967
        %1019 = vmatprep.subr.mxu0 0.0
        %1020 = vmatpush1.msra.mxu0 %v968
        %1021 = vmatprep.subr.mxu0 0.0
        %1022 = vmatpush1.msra.mxu0 %v969
        %1023 = vmatprep.subr.mxu0 0.0
        %1024 = vmatpush1.msra.mxu0 %v970
        %1025 = vmatprep.subr.mxu0 0.0
        %1026 = vmatpush1.msra.mxu0 %v971
        %1027 = vmatprep.subr.mxu0 0.0
        %1028 = vmatpush1.msra.mxu0 %v972
        %1029 = vmatprep.subr.mxu0 0.0
        %1030 = vmatpush1.msra.mxu0 %v973
        %1031 = vmatprep.subr.mxu0 0.0
        %1032 = vmatpush1.msra.mxu0 %v974
        %1033 = vmatprep.subr.mxu0 0.0
        %1034 = vmatpush1.msra.mxu0 %v975
        %1035 = vmatprep.subr.mxu0 0.0
        %1036 = vmatpush1.msra.mxu0 %v976
        %1037 = vmatprep.subr.mxu0 0.0
        %1038 = vmatpush1.msra.mxu0 %v977
        %1039 = vmatprep.subr.mxu0 0.0
        %1040 = vmatpush1.msra.mxu0 %v978
        %1041 = vmatprep.subr.mxu0 0.0
        %1042 = vmatpush1.msra.mxu0 %v979
        %1043 = vmatprep.subr.mxu0 0.0
        %1044 = vmatpush1.msra.mxu0 %v980
        %1045 = vmatprep.subr.mxu0 0.0
        %1046 = vmatpush1.msra.mxu0 %v981
        %1047 = vmatprep.subr.mxu0 0.0
        %1048 = vmatpush1.msra.mxu0 %v982
        %1049 = vmatprep.subr.mxu0 0.0
        %1050 = vmatpush1.msra.mxu0 %v983
        %1051 = vmatprep.subr.mxu0 0.0
        %1052 = vmatpush1.msra.mxu0 %v984
        %1053 = vmatprep.subr.mxu0 0.0
        %1054 = vmatpush1.msra.mxu0 %v985
        %1055 = vmatprep.subr.mxu0 0.0
        %1056 = vmatpush1.msra.mxu0 %v986
        %1057 = vmatprep.subr.mxu0 0.0
        %1058 = vmatpush1.msra.mxu0 %v987
        %1059 = vmatprep.mubr.f32.mxu0 %v924
        %1060 = vmatmul.mubr.f32.gmra.mrb[0].mxu0 %v892
        %v1061 = vpop.f32.mrb[0].mxu0
        %v1062 = vadd.f32 %v993, %v1061
        %v1063 = vpop.f32.mrb[0].mxu0
        %1064 = vmatprep.mubr.f32.mxu0 %v925
        %1065 = vmatmul.mubr.f32.gmra.mrb[0].mxu0 %v893
        %v1066 = vpop.f32.mrb[0].mxu0
        %v1067 = vadd.f32 %v993, %v1066
        %v1068 = vpop.f32.mrb[0].mxu0
        %1069 = vmatprep.mubr.f32.mxu0 %v926
        %1070 = vmatmul.mubr.f32.gmra.mrb[0].mxu0 %v894
        %v1071 = vpop.f32.mrb[0].mxu0
        %v1072 = vadd.f32 %v993, %v1071
        %v1073 = vpop.f32.mrb[0].mxu0
        %1074 = vmatprep.mubr.f32.mxu0 %v927
        %1075 = vmatmul.mubr.f32.gmra.mrb[0].mxu0 %v895
        %v1076 = vpop.f32.mrb[0].mxu0
        %v1077 = vadd.f32 %v993, %v1076
        %v1078 = vpop.f32.mrb[0].mxu0
        %1079 = vmatprep.mubr.f32.mxu0 %v928
        %1080 = vmatmul.mubr.f32.gmra.mrb[0].mxu0 %v896
        %v1081 = vpop.f32.mrb[0].mxu0
        %v1082 = vadd.f32 %v993, %v1081
        %v1083 = vpop.f32.mrb[0].mxu0
        %1084 = vmatprep.mubr.f32.mxu0 %v929
        %1085 = vmatmul.mubr.f32.gmra.mrb[0].mxu0 %v897
        %v1086 = vpop.f32.mrb[0].mxu0
        %v1087 = vadd.f32 %v993, %v1086
        %v1088 = vpop.f32.mrb[0].mxu0
        %1089 = vmatprep.mubr.f32.mxu0 %v930
        %1090 = vmatmul.mubr.f32.gmra.mrb[0].mxu0 %v898
        %v1091 = vpop.f32.mrb[0].mxu0
        %v1092 = vadd.f32 %v993, %v1091
        %v1093 = vpop.f32.mrb[0].mxu0
        %1094 = vmatprep.mubr.f32.mxu0 %v931
        %1095 = vmatmul.mubr.f32.gmra.mrb[0].mxu0 %v899
        %v1096 = vpop.f32.mrb[0].mxu0
        %v1097 = vadd.f32 %v993, %v1096
        %v1098 = vpop.f32.mrb[0].mxu0
        %1099 = vmatprep.mubr.f32.mxu0 %v932
        %1100 = vmatmul.mubr.f32.gmra.mrb[0].mxu0 %v900
        %v1101 = vpop.f32.mrb[0].mxu0
        %v1102 = vadd.f32 %v993, %v1101
        %v1103 = vpop.f32.mrb[0].mxu0
        %1104 = vmatprep.mubr.f32.mxu0 %v933
        %1105 = vmatmul.mubr.f32.gmra.mrb[0].mxu0 %v901
        %v1106 = vpop.f32.mrb[0].mxu0
        %v1107 = vadd.f32 %v993, %v1106
        %v1108 = vpop.f32.mrb[0].mxu0
        %1109 = vmatprep.mubr.f32.mxu0 %v934
        %1110 = vmatmul.mubr.f32.gmra.mrb[0].mxu0 %v902
        %v1111 = vpop.f32.mrb[0].mxu0
        %v1112 = vadd.f32 %v993, %v1111
        %v1113 = vpop.f32.mrb[0].mxu0
        %1114 = vmatprep.mubr.f32.mxu0 %v935
        %1115 = vmatmul.mubr.f32.gmra.mrb[0].mxu0 %v903
        %v1116 = vpop.f32.mrb[0].mxu0
        %v1117 = vadd.f32 %v993, %v1116
        %v1118 = vpop.f32.mrb[0].mxu0
        %1119 = vmatprep.mubr.f32.mxu0 %v936
        %1120 = vmatmul.mubr.f32.gmra.mrb[0].mxu0 %v904
        %v1121 = vpop.f32.mrb[0].mxu0
        %v1122 = vadd.f32 %v993, %v1121
        %v1123 = vpop.f32.mrb[0].mxu0
        %1124 = vmatprep.mubr.f32.mxu0 %v937
        %1125 = vmatmul.mubr.f32.gmra.mrb[0].mxu0 %v905
        %v1126 = vpop.f32.mrb[0].mxu0
        %v1127 = vadd.f32 %v993, %v1126
        %v1128 = vpop.f32.mrb[0].mxu0
        %1129 = vmatprep.mubr.f32.mxu0 %v938
        %1130 = vmatmul.mubr.f32.gmra.mrb[0].mxu0 %v906
        %v1131 = vpop.f32.mrb[0].mxu0
        %v1132 = vadd.f32 %v993, %v1131
        %v1133 = vpop.f32.mrb[0].mxu0
        %1134 = vmatprep.mubr.f32.mxu0 %v939
        %1135 = vmatmul.mubr.f32.gmra.mrb[0].mxu0 %v907
        %v1136 = vpop.f32.mrb[0].mxu0
        %v1137 = vadd.f32 %v993, %v1136
        %v1138 = vpop.f32.mrb[0].mxu0
        %1139 = vmatprep.mubr.f32.mxu0 %v940
        %1140 = vmatmul.mubr.f32.gmra.mrb[0].mxu0 %v908
        %v1141 = vpop.f32.mrb[0].mxu0
        %v1142 = vadd.f32 %v993, %v1141
        %v1143 = vpop.f32.mrb[0].mxu0
        %1144 = vmatprep.mubr.f32.mxu0 %v941
        %1145 = vmatmul.mubr.f32.gmra.mrb[0].mxu0 %v909
        %v1146 = vpop.f32.mrb[0].mxu0
        %v1147 = vadd.f32 %v993, %v1146
        %v1148 = vpop.f32.mrb[0].mxu0
        %1149 = vmatprep.mubr.f32.mxu0 %v942
        %1150 = vmatmul.mubr.f32.gmra.mrb[0].mxu0 %v910
        %v1151 = vpop.f32.mrb[0].mxu0
        %v1152 = vadd.f32 %v993, %v1151
        %v1153 = vpop.f32.mrb[0].mxu0
        %1154 = vmatprep.mubr.f32.mxu0 %v943
        %1155 = vmatmul.mubr.f32.gmra.mrb[0].mxu0 %v911
        %v1156 = vpop.f32.mrb[0].mxu0
        %v1157 = vadd.f32 %v993, %v1156
        %v1158 = vpop.f32.mrb[0].mxu0
        %1159 = vmatprep.mubr.f32.mxu0 %v944
        %1160 = vmatmul.mubr.f32.gmra.mrb[0].mxu0 %v912
        %v1161 = vpop.f32.mrb[0].mxu0
        %v1162 = vadd.f32 %v993, %v1161
        %v1163 = vpop.f32.mrb[0].mxu0
        %1164 = vmatprep.mubr.f32.mxu0 %v945
        %1165 = vmatmul.mubr.f32.gmra.mrb[0].mxu0 %v913
        %v1166 = vpop.f32.mrb[0].mxu0
        %v1167 = vadd.f32 %v993, %v1166
        %v1168 = vpop.f32.mrb[0].mxu0
        %1169 = vmatprep.mubr.f32.mxu0 %v946
        %1170 = vmatmul.mubr.f32.gmra.mrb[0].mxu0 %v914
        %v1171 = vpop.f32.mrb[0].mxu0
        %v1172 = vadd.f32 %v993, %v1171
        %v1173 = vpop.f32.mrb[0].mxu0
        %1174 = vmatprep.mubr.f32.mxu0 %v947
        %1175 = vmatmul.mubr.f32.gmra.mrb[0].mxu0 %v915
        %v1176 = vpop.f32.mrb[0].mxu0
        %v1177 = vadd.f32 %v993, %v1176
        %v1178 = vpop.f32.mrb[0].mxu0
        %1179 = vmatprep.mubr.f32.mxu0 %v948
        %1180 = vmatmul.mubr.f32.gmra.mrb[0].mxu0 %v916
        %v1181 = vpop.f32.mrb[0].mxu0
        %v1182 = vadd.f32 %v993, %v1181
        %v1183 = vpop.f32.mrb[0].mxu0
        %1184 = vmatprep.mubr.f32.mxu0 %v949
        %1185 = vmatmul.mubr.f32.gmra.mrb[0].mxu0 %v917
        %v1186 = vpop.f32.mrb[0].mxu0
        %v1187 = vadd.f32 %v993, %v1186
        %v1188 = vpop.f32.mrb[0].mxu0
        %1189 = vmatprep.mubr.f32.mxu0 %v950
        %1190 = vmatmul.mubr.f32.gmra.mrb[0].mxu0 %v918
        %v1191 = vpop.f32.mrb[0].mxu0
        %v1192 = vadd.f32 %v993, %v1191
        %v1193 = vpop.f32.mrb[0].mxu0
        %1194 = vmatprep.mubr.f32.mxu0 %v951
        %1195 = vmatmul.mubr.f32.gmra.mrb[0].mxu0 %v919
        %v1196 = vpop.f32.mrb[0].mxu0
        %v1197 = vadd.f32 %v993, %v1196
        %v1198 = vpop.f32.mrb[0].mxu0
        %1199 = vmatprep.mubr.f32.mxu0 %v952
        %1200 = vmatmul.mubr.f32.gmra.mrb[0].mxu0 %v920
        %v1201 = vpop.f32.mrb[0].mxu0
        %v1202 = vadd.f32 %v993, %v1201
        %v1203 = vpop.f32.mrb[0].mxu0
        %1204 = vmatprep.mubr.f32.mxu0 %v953
        %1205 = vmatmul.mubr.f32.gmra.mrb[0].mxu0 %v921
        %v1206 = vpop.f32.mrb[0].mxu0
        %v1207 = vadd.f32 %v993, %v1206
        %v1208 = vpop.f32.mrb[0].mxu0
        %1209 = vmatprep.mubr.f32.mxu0 %v954
        %1210 = vmatmul.mubr.f32.gmra.mrb[0].mxu0 %v922
        %v1211 = vpop.f32.mrb[0].mxu0
        %v1212 = vadd.f32 %v993, %v1211
        %v1213 = vpop.f32.mrb[0].mxu0
        %1214 = vmatprep.mubr.f32.mxu0 %v955
        %1215 = vmatmul.mubr.f32.gmra.mrb[0].mxu0 %v923
        %v1216 = vpop.f32.mrb[0].mxu0
        %v1217 = vadd.f32 %v993, %v1216
        %v1218 = vpop.f32.mrb[0].mxu0
        %1219 = vdwg.mxu0
        %v1220 = vmax.f32 %v1062, 0.0
        %v1221 = vmax.f32 %v1067, 0.0
        %v1222 = vmax.f32 %v1072, 0.0
        %v1223 = vmax.f32 %v1077, 0.0
        %v1224 = vmax.f32 %v1082, 0.0
        %v1225 = vmax.f32 %v1087, 0.0
        %v1226 = vmax.f32 %v1092, 0.0
        %v1227 = vmax.f32 %v1097, 0.0
        %v1228 = vmax.f32 %v1102, 0.0
        %v1229 = vmax.f32 %v1107, 0.0
        %v1230 = vmax.f32 %v1112, 0.0
        %v1231 = vmax.f32 %v1117, 0.0
        %v1232 = vmax.f32 %v1122, 0.0
        %v1233 = vmax.f32 %v1127, 0.0
        %v1234 = vmax.f32 %v1132, 0.0
        %v1235 = vmax.f32 %v1137, 0.0
        %v1236 = vmax.f32 %v1142, 0.0
        %v1237 = vmax.f32 %v1147, 0.0
        %v1238 = vmax.f32 %v1152, 0.0
        %v1239 = vmax.f32 %v1157, 0.0
        %v1240 = vmax.f32 %v1162, 0.0
        %v1241 = vmax.f32 %v1167, 0.0
        %v1242 = vmax.f32 %v1172, 0.0
        %v1243 = vmax.f32 %v1177, 0.0
        %v1244 = vmax.f32 %v1182, 0.0
        %v1245 = vmax.f32 %v1187, 0.0
        %v1246 = vmax.f32 %v1192, 0.0
        %v1247 = vmax.f32 %v1197, 0.0
        %v1248 = vmax.f32 %v1202, 0.0
        %v1249 = vmax.f32 %v1207, 0.0
        %v1250 = vmax.f32 %v1212, 0.0
        %v1251 = vmax.f32 %v1217, 0.0
        %1252 = vst.msk [vmem:[%s475 + $0x1] sm:$0xff] %vm309, %v1220
        %1253 = vst.msk [vmem:[%s475 + $0x9] sm:$0xff] %vm309, %v1221
        %1254 = vst.msk [vmem:[%s475 + $0x19] sm:$0xff] %vm309, %v1222
        %1255 = vst.msk [vmem:[%s475 + $0x21] sm:$0xff] %vm309, %v1223
        %1256 = vst.msk [vmem:[%s475 + $0x31] sm:$0xff] %vm309, %v1224
        %1257 = vst.msk [vmem:[%s475 + $0x39] sm:$0xff] %vm309, %v1225
        %1258 = vst.msk [vmem:[%s475 + $0x49] sm:$0xff] %vm309, %v1226
        %1259 = vst.msk [vmem:[%s475 + $0x51] sm:$0xff] %vm309, %v1227
        %1260 = vst.msk [vmem:[%s475 + $0x61] sm:$0xff] %vm309, %v1228
        %1261 = vst.msk [vmem:[%s475 + $0x69] sm:$0xff] %vm309, %v1229
        %1262 = vst.msk [vmem:[%s475 + $0x79] sm:$0xff] %vm309, %v1230
        %1263 = vst.msk [vmem:[%s475 + $0x81] sm:$0xff] %vm309, %v1231
        %1264 = vst.msk [vmem:[%s475 + $0x91] sm:$0xff] %vm309, %v1232
        %1265 = vst.msk [vmem:[%s475 + $0x99] sm:$0xff] %vm309, %v1233
        %1266 = vst.msk [vmem:[%s475 + $0xa9] sm:$0xff] %vm309, %v1234
        %1267 = vst.msk [vmem:[%s475 + $0xb1] sm:$0xff] %vm309, %v1235
        %1268 = vst.msk [vmem:[%s475 + $0xc1] sm:$0xff] %vm309, %v1236
        %1269 = vst.msk [vmem:[%s475 + $0xc9] sm:$0xff] %vm309, %v1237
        %1270 = vst.msk [vmem:[%s475 + $0xd9] sm:$0xff] %vm309, %v1238
        %1271 = vst.msk [vmem:[%s475 + $0xe1] sm:$0xff] %vm309, %v1239
        %1272 = vst.msk [vmem:[%s475 + $0xf1] sm:$0xff] %vm309, %v1240
        %1273 = vst.msk [vmem:[%s475 + $0xf9] sm:$0xff] %vm309, %v1241
        %1274 = vst.msk [vmem:[%s475 + $0x109] sm:$0xff] %vm309, %v1242
        %1275 = vst.msk [vmem:[%s475 + $0x111] sm:$0xff] %vm309, %v1243
        %1276 = vst.msk [vmem:[%s475 + $0x121] sm:$0xff] %vm309, %v1244
        %1277 = vst.msk [vmem:[%s475 + $0x129] sm:$0xff] %vm309, %v1245
        %1278 = vst.msk [vmem:[%s475 + $0x139] sm:$0xff] %vm309, %v1246
        %1279 = vst.msk [vmem:[%s475 + $0x141] sm:$0xff] %vm309, %v1247
        %1280 = vst.msk [vmem:[%s475 + $0x151] sm:$0xff] %vm309, %v1248
        %1281 = vst.msk [vmem:[%s475 + $0x159] sm:$0xff] %vm309, %v1249
        %1282 = vst.msk [vmem:[%s475 + $0x169] sm:$0xff] %vm309, %v1250
        %1283 = vst.msk [vmem:[%s475 + $0x171] sm:$0xff] %vm309, %v1251
        %v1284 = vld [vmem:[#allocation2] sm:$0xff]
        %v1285 = vld [vmem:[#allocation2 + $0x8] sm:$0xff]
        %v1286 = vld [vmem:[#allocation2 + $0x18] sm:$0xff]
        %v1287 = vld [vmem:[#allocation2 + $0x20] sm:$0xff]
        %v1288 = vld [vmem:[#allocation2 + $0x30] sm:$0xff]
        %v1289 = vld [vmem:[#allocation2 + $0x38] sm:$0xff]
        %v1290 = vld [vmem:[#allocation2 + $0x48] sm:$0xff]
        %v1291 = vld [vmem:[#allocation2 + $0x50] sm:$0xff]
        %v1292 = vld [vmem:[#allocation2 + $0x60] sm:$0xff]
        %v1293 = vld [vmem:[#allocation2 + $0x68] sm:$0xff]
        %v1294 = vld [vmem:[#allocation2 + $0x78] sm:$0xff]
        %v1295 = vld [vmem:[#allocation2 + $0x80] sm:$0xff]
        %v1296 = vld [vmem:[#allocation2 + $0x90] sm:$0xff]
        %v1297 = vld [vmem:[#allocation2 + $0x98] sm:$0xff]
        %v1298 = vld [vmem:[#allocation2 + $0xa8] sm:$0xff]
        %v1299 = vld [vmem:[#allocation2 + $0xb0] sm:$0xff]
        %v1300 = vld [vmem:[#allocation2 + $0xc0] sm:$0xff]
        %v1301 = vld [vmem:[#allocation2 + $0xc8] sm:$0xff]
        %v1302 = vld [vmem:[#allocation2 + $0xd8] sm:$0xff]
        %v1303 = vld [vmem:[#allocation2 + $0xe0] sm:$0xff]
        %v1304 = vld [vmem:[#allocation2 + $0xf0] sm:$0xff]
        %v1305 = vld [vmem:[#allocation2 + $0xf8] sm:$0xff]
        %v1306 = vld [vmem:[#allocation2 + $0x108] sm:$0xff]
        %v1307 = vld [vmem:[#allocation2 + $0x110] sm:$0xff]
        %v1308 = vld [vmem:[#allocation2 + $0x120] sm:$0xff]
        %v1309 = vld [vmem:[#allocation2 + $0x128] sm:$0xff]
        %v1310 = vld [vmem:[#allocation2 + $0x138] sm:$0xff]
        %v1311 = vld [vmem:[#allocation2 + $0x140] sm:$0xff]
        %v1312 = vld [vmem:[#allocation2 + $0x150] sm:$0xff]
        %v1313 = vld [vmem:[#allocation2 + $0x158] sm:$0xff]
        %v1314 = vld [vmem:[#allocation2 + $0x168] sm:$0xff]
        %v1315 = vld [vmem:[#allocation2 + $0x170] sm:$0xff]
        %v1316 = vld [vmem:[#allocation2 + $0x1] sm:$0xff]
        %v1317 = vld [vmem:[#allocation2 + $0x9] sm:$0xff]
        %v1318 = vld [vmem:[#allocation2 + $0x19] sm:$0xff]
        %v1319 = vld [vmem:[#allocation2 + $0x21] sm:$0xff]
        %v1320 = vld [vmem:[#allocation2 + $0x31] sm:$0xff]
        %v1321 = vld [vmem:[#allocation2 + $0x39] sm:$0xff]
        %v1322 = vld [vmem:[#allocation2 + $0x49] sm:$0xff]
        %v1323 = vld [vmem:[#allocation2 + $0x51] sm:$0xff]
        %v1324 = vld [vmem:[#allocation2 + $0x61] sm:$0xff]
        %v1325 = vld [vmem:[#allocation2 + $0x69] sm:$0xff]
        %v1326 = vld [vmem:[#allocation2 + $0x79] sm:$0xff]
        %v1327 = vld [vmem:[#allocation2 + $0x81] sm:$0xff]
        %v1328 = vld [vmem:[#allocation2 + $0x91] sm:$0xff]
        %v1329 = vld [vmem:[#allocation2 + $0x99] sm:$0xff]
        %v1330 = vld [vmem:[#allocation2 + $0xa9] sm:$0xff]
        %v1331 = vld [vmem:[#allocation2 + $0xb1] sm:$0xff]
        %v1332 = vld [vmem:[#allocation2 + $0xc1] sm:$0xff]
        %v1333 = vld [vmem:[#allocation2 + $0xc9] sm:$0xff]
        %v1334 = vld [vmem:[#allocation2 + $0xd9] sm:$0xff]
        %v1335 = vld [vmem:[#allocation2 + $0xe1] sm:$0xff]
        %v1336 = vld [vmem:[#allocation2 + $0xf1] sm:$0xff]
        %v1337 = vld [vmem:[#allocation2 + $0xf9] sm:$0xff]
        %v1338 = vld [vmem:[#allocation2 + $0x109] sm:$0xff]
        %v1339 = vld [vmem:[#allocation2 + $0x111] sm:$0xff]
        %v1340 = vld [vmem:[#allocation2 + $0x121] sm:$0xff]
        %v1341 = vld [vmem:[#allocation2 + $0x129] sm:$0xff]
        %v1342 = vld [vmem:[#allocation2 + $0x139] sm:$0xff]
        %v1343 = vld [vmem:[#allocation2 + $0x141] sm:$0xff]
        %v1344 = vld [vmem:[#allocation2 + $0x151] sm:$0xff]
        %v1345 = vld [vmem:[#allocation2 + $0x159] sm:$0xff]
        %v1346 = vld [vmem:[#allocation2 + $0x169] sm:$0xff]
        %v1347 = vld [vmem:[#allocation2 + $0x171] sm:$0xff]
        %v1348 = vld [vmem:[#allocation2 + $0x2] sm:$0xff]
        %v1349 = vld [vmem:[#allocation2 + $0xa] sm:$0xff]
        %v1350 = vld [vmem:[#allocation2 + $0x1a] sm:$0xff]
        %v1351 = vld [vmem:[#allocation2 + $0x22] sm:$0xff]
        %v1352 = vld [vmem:[#allocation2 + $0x32] sm:$0xff]
        %v1353 = vld [vmem:[#allocation2 + $0x3a] sm:$0xff]
        %v1354 = vld [vmem:[#allocation2 + $0x4a] sm:$0xff]
        %v1355 = vld [vmem:[#allocation2 + $0x52] sm:$0xff]
        %v1356 = vld [vmem:[#allocation2 + $0x62] sm:$0xff]
        %v1357 = vld [vmem:[#allocation2 + $0x6a] sm:$0xff]
        %v1358 = vld [vmem:[#allocation2 + $0x7a] sm:$0xff]
        %v1359 = vld [vmem:[#allocation2 + $0x82] sm:$0xff]
        %v1360 = vld [vmem:[#allocation2 + $0x92] sm:$0xff]
        %v1361 = vld [vmem:[#allocation2 + $0x9a] sm:$0xff]
        %v1362 = vld [vmem:[#allocation2 + $0xaa] sm:$0xff]
        %v1363 = vld [vmem:[#allocation2 + $0xb2] sm:$0xff]
        %v1364 = vld [vmem:[#allocation2 + $0xc2] sm:$0xff]
        %v1365 = vld [vmem:[#allocation2 + $0xca] sm:$0xff]
        %v1366 = vld [vmem:[#allocation2 + $0xda] sm:$0xff]
        %v1367 = vld [vmem:[#allocation2 + $0xe2] sm:$0xff]
        %v1368 = vld [vmem:[#allocation2 + $0xf2] sm:$0xff]
        %v1369 = vld [vmem:[#allocation2 + $0xfa] sm:$0xff]
        %v1370 = vld [vmem:[#allocation2 + $0x10a] sm:$0xff]
        %v1371 = vld [vmem:[#allocation2 + $0x112] sm:$0xff]
        %v1372 = vld [vmem:[#allocation2 + $0x122] sm:$0xff]
        %v1373 = vld [vmem:[#allocation2 + $0x12a] sm:$0xff]
        %v1374 = vld [vmem:[#allocation2 + $0x13a] sm:$0xff]
        %v1375 = vld [vmem:[#allocation2 + $0x142] sm:$0xff]
        %v1376 = vld [vmem:[#allocation2 + $0x152] sm:$0xff]
        %v1377 = vld [vmem:[#allocation2 + $0x15a] sm:$0xff]
        %v1378 = vld [vmem:[#allocation2 + $0x16a] sm:$0xff]
        %v1379 = vld [vmem:[#allocation2 + $0x172] sm:$0xff]
        %v1380 = vld [vmem:[%s475] sm:$0xff]
        %v1381 = vld [vmem:[%s475 + $0x8] sm:$0xff]
        %v1382 = vld [vmem:[%s475 + $0x18] sm:$0xff]
        %v1383 = vld [vmem:[%s475 + $0x20] sm:$0xff]
        %v1384 = vld [vmem:[%s475 + $0x30] sm:$0xff]
        %v1385 = vld [vmem:[%s475 + $0x38] sm:$0xff]
        %v1386 = vld [vmem:[%s475 + $0x48] sm:$0xff]
        %v1387 = vld [vmem:[%s475 + $0x50] sm:$0xff]
        %v1388 = vld [vmem:[%s475 + $0x60] sm:$0xff]
        %v1389 = vld [vmem:[%s475 + $0x68] sm:$0xff]
        %v1390 = vld [vmem:[%s475 + $0x78] sm:$0xff]
        %v1391 = vld [vmem:[%s475 + $0x80] sm:$0xff]
        %v1392 = vld [vmem:[%s475 + $0x90] sm:$0xff]
        %v1393 = vld [vmem:[%s475 + $0x98] sm:$0xff]
        %v1394 = vld [vmem:[%s475 + $0xa8] sm:$0xff]
        %v1395 = vld [vmem:[%s475 + $0xb0] sm:$0xff]
        %v1396 = vld [vmem:[%s475 + $0xc0] sm:$0xff]
        %v1397 = vld [vmem:[%s475 + $0xc8] sm:$0xff]
        %v1398 = vld [vmem:[%s475 + $0xd8] sm:$0xff]
        %v1399 = vld [vmem:[%s475 + $0xe0] sm:$0xff]
        %v1400 = vld [vmem:[%s475 + $0xf0] sm:$0xff]
        %v1401 = vld [vmem:[%s475 + $0xf8] sm:$0xff]
        %v1402 = vld [vmem:[%s475 + $0x108] sm:$0xff]
        %v1403 = vld [vmem:[%s475 + $0x110] sm:$0xff]
        %v1404 = vld [vmem:[%s475 + $0x120] sm:$0xff]
        %v1405 = vld [vmem:[%s475 + $0x128] sm:$0xff]
        %v1406 = vld [vmem:[%s475 + $0x138] sm:$0xff]
        %v1407 = vld [vmem:[%s475 + $0x140] sm:$0xff]
        %v1408 = vld [vmem:[%s475 + $0x150] sm:$0xff]
        %v1409 = vld [vmem:[%s475 + $0x158] sm:$0xff]
        %v1410 = vld [vmem:[%s475 + $0x168] sm:$0xff]
        %v1411 = vld [vmem:[%s475 + $0x170] sm:$0xff]
        %1444 = vrot.lane.b32.xlu0 %v1316, 64
        %v1445 = vpop.permute.xlu0 %1444
        %1446 = vrot.lane.b32.xlu0 %v1317, 64
        %v1447 = vpop.permute.xlu0 %1446
        %1448 = vrot.lane.b32.xlu0 %v1318, 64
        %v1449 = vpop.permute.xlu0 %1448
        %1450 = vrot.lane.b32.xlu0 %v1319, 64
        %v1451 = vpop.permute.xlu0 %1450
        %1452 = vrot.lane.b32.xlu0 %v1320, 64
        %v1453 = vpop.permute.xlu0 %1452
        %1454 = vrot.lane.b32.xlu0 %v1321, 64
        %v1455 = vpop.permute.xlu0 %1454
        %1456 = vrot.lane.b32.xlu0 %v1322, 64
        %v1457 = vpop.permute.xlu0 %1456
        %1458 = vrot.lane.b32.xlu0 %v1323, 64
        %v1459 = vpop.permute.xlu0 %1458
        %1460 = vrot.lane.b32.xlu0 %v1324, 64
        %v1461 = vpop.permute.xlu0 %1460
        %1462 = vrot.lane.b32.xlu0 %v1325, 64
        %v1463 = vpop.permute.xlu0 %1462
        %1464 = vrot.lane.b32.xlu0 %v1326, 64
        %v1465 = vpop.permute.xlu0 %1464
        %1466 = vrot.lane.b32.xlu0 %v1327, 64
        %v1467 = vpop.permute.xlu0 %1466
        %1468 = vrot.lane.b32.xlu0 %v1328, 64
        %v1469 = vpop.permute.xlu0 %1468
        %1470 = vrot.lane.b32.xlu0 %v1329, 64
        %v1471 = vpop.permute.xlu0 %1470
        %1472 = vrot.lane.b32.xlu0 %v1330, 64
        %v1473 = vpop.permute.xlu0 %1472
        %1474 = vrot.lane.b32.xlu0 %v1331, 64
        %v1475 = vpop.permute.xlu0 %1474
        %1476 = vrot.lane.b32.xlu0 %v1332, 64
        %v1477 = vpop.permute.xlu0 %1476
        %1478 = vrot.lane.b32.xlu0 %v1333, 64
        %v1479 = vpop.permute.xlu0 %1478
        %1480 = vrot.lane.b32.xlu0 %v1334, 64
        %v1481 = vpop.permute.xlu0 %1480
        %1482 = vrot.lane.b32.xlu0 %v1335, 64
        %v1483 = vpop.permute.xlu0 %1482
        %1484 = vrot.lane.b32.xlu0 %v1336, 64
        %v1485 = vpop.permute.xlu0 %1484
        %1486 = vrot.lane.b32.xlu0 %v1337, 64
        %v1487 = vpop.permute.xlu0 %1486
        %1488 = vrot.lane.b32.xlu0 %v1338, 64
        %v1489 = vpop.permute.xlu0 %1488
        %1490 = vrot.lane.b32.xlu0 %v1339, 64
        %v1491 = vpop.permute.xlu0 %1490
        %1492 = vrot.lane.b32.xlu0 %v1340, 64
        %v1493 = vpop.permute.xlu0 %1492
        %1494 = vrot.lane.b32.xlu0 %v1341, 64
        %v1495 = vpop.permute.xlu0 %1494
        %1496 = vrot.lane.b32.xlu0 %v1342, 64
        %v1497 = vpop.permute.xlu0 %1496
        %1498 = vrot.lane.b32.xlu0 %v1343, 64
        %v1499 = vpop.permute.xlu0 %1498
        %1500 = vrot.lane.b32.xlu0 %v1344, 64
        %v1501 = vpop.permute.xlu0 %1500
        %1502 = vrot.lane.b32.xlu0 %v1345, 64
        %v1503 = vpop.permute.xlu0 %1502
        %1504 = vrot.lane.b32.xlu0 %v1346, 64
        %v1505 = vpop.permute.xlu0 %1504
        %1506 = vrot.lane.b32.xlu0 %v1347, 64
        %v1507 = vpop.permute.xlu0 %1506
        %1572 = vrot.lane.b32.xlu0 %v1380, 64
        %v1573 = vpop.permute.xlu0 %1572
        %1574 = vrot.lane.b32.xlu0 %v1381, 64
        %v1575 = vpop.permute.xlu0 %1574
        %1576 = vrot.lane.b32.xlu0 %v1382, 64
        %v1577 = vpop.permute.xlu0 %1576
        %1578 = vrot.lane.b32.xlu0 %v1383, 64
        %v1579 = vpop.permute.xlu0 %1578
        %1580 = vrot.lane.b32.xlu0 %v1384, 64
        %v1581 = vpop.permute.xlu0 %1580
        %1582 = vrot.lane.b32.xlu0 %v1385, 64
        %v1583 = vpop.permute.xlu0 %1582
        %1584 = vrot.lane.b32.xlu0 %v1386, 64
        %v1585 = vpop.permute.xlu0 %1584
        %1586 = vrot.lane.b32.xlu0 %v1387, 64
        %v1587 = vpop.permute.xlu0 %1586
        %1588 = vrot.lane.b32.xlu0 %v1388, 64
        %v1589 = vpop.permute.xlu0 %1588
        %1590 = vrot.lane.b32.xlu0 %v1389, 64
        %v1591 = vpop.permute.xlu0 %1590
        %1592 = vrot.lane.b32.xlu0 %v1390, 64
        %v1593 = vpop.permute.xlu0 %1592
        %1594 = vrot.lane.b32.xlu0 %v1391, 64
        %v1595 = vpop.permute.xlu0 %1594
        %1596 = vrot.lane.b32.xlu0 %v1392, 64
        %v1597 = vpop.permute.xlu0 %1596
        %1598 = vrot.lane.b32.xlu0 %v1393, 64
        %v1599 = vpop.permute.xlu0 %1598
        %1600 = vrot.lane.b32.xlu0 %v1394, 64
        %v1601 = vpop.permute.xlu0 %1600
        %1602 = vrot.lane.b32.xlu0 %v1395, 64
        %v1603 = vpop.permute.xlu0 %1602
        %1604 = vrot.lane.b32.xlu0 %v1396, 64
        %v1605 = vpop.permute.xlu0 %1604
        %1606 = vrot.lane.b32.xlu0 %v1397, 64
        %v1607 = vpop.permute.xlu0 %1606
        %1608 = vrot.lane.b32.xlu0 %v1398, 64
        %v1609 = vpop.permute.xlu0 %1608
        %1610 = vrot.lane.b32.xlu0 %v1399, 64
        %v1611 = vpop.permute.xlu0 %1610
        %1612 = vrot.lane.b32.xlu0 %v1400, 64
        %v1613 = vpop.permute.xlu0 %1612
        %1614 = vrot.lane.b32.xlu0 %v1401, 64
        %v1615 = vpop.permute.xlu0 %1614
        %1616 = vrot.lane.b32.xlu0 %v1402, 64
        %v1617 = vpop.permute.xlu0 %1616
        %1618 = vrot.lane.b32.xlu0 %v1403, 64
        %v1619 = vpop.permute.xlu0 %1618
        %1620 = vrot.lane.b32.xlu0 %v1404, 64
        %v1621 = vpop.permute.xlu0 %1620
        %1622 = vrot.lane.b32.xlu0 %v1405, 64
        %v1623 = vpop.permute.xlu0 %1622
        %1624 = vrot.lane.b32.xlu0 %v1406, 64
        %v1625 = vpop.permute.xlu0 %1624
        %1626 = vrot.lane.b32.xlu0 %v1407, 64
        %v1627 = vpop.permute.xlu0 %1626
        %1628 = vrot.lane.b32.xlu0 %v1408, 64
        %v1629 = vpop.permute.xlu0 %1628
        %1630 = vrot.lane.b32.xlu0 %v1409, 64
        %v1631 = vpop.permute.xlu0 %1630
        %1632 = vrot.lane.b32.xlu0 %v1410, 64
        %v1633 = vpop.permute.xlu0 %1632
        %1634 = vrot.lane.b32.xlu0 %v1411, 64
        %v1635 = vpop.permute.xlu0 %1634
        %v1668 = vsel %vm309, %v1284, %v1445
        %v1669 = vsel %vm309, %v1285, %v1447
        %v1670 = vsel %vm309, %v1286, %v1449
        %v1671 = vsel %vm309, %v1287, %v1451
        %v1672 = vsel %vm309, %v1288, %v1453
        %v1673 = vsel %vm309, %v1289, %v1455
        %v1674 = vsel %vm309, %v1290, %v1457
        %v1675 = vsel %vm309, %v1291, %v1459
        %v1676 = vsel %vm309, %v1292, %v1461
        %v1677 = vsel %vm309, %v1293, %v1463
        %v1678 = vsel %vm309, %v1294, %v1465
        %v1679 = vsel %vm309, %v1295, %v1467
        %v1680 = vsel %vm309, %v1296, %v1469
        %v1681 = vsel %vm309, %v1297, %v1471
        %v1682 = vsel %vm309, %v1298, %v1473
        %v1683 = vsel %vm309, %v1299, %v1475
        %v1684 = vsel %vm309, %v1300, %v1477
        %v1685 = vsel %vm309, %v1301, %v1479
        %v1686 = vsel %vm309, %v1302, %v1481
        %v1687 = vsel %vm309, %v1303, %v1483
        %v1688 = vsel %vm309, %v1304, %v1485
        %v1689 = vsel %vm309, %v1305, %v1487
        %v1690 = vsel %vm309, %v1306, %v1489
        %v1691 = vsel %vm309, %v1307, %v1491
        %v1692 = vsel %vm309, %v1308, %v1493
        %v1693 = vsel %vm309, %v1309, %v1495
        %v1694 = vsel %vm309, %v1310, %v1497
        %v1695 = vsel %vm309, %v1311, %v1499
        %v1696 = vsel %vm309, %v1312, %v1501
        %v1697 = vsel %vm309, %v1313, %v1503
        %v1698 = vsel %vm309, %v1314, %v1505
        %v1699 = vsel %vm309, %v1315, %v1507
        %v1700 = vsel %vm309, %v1348, %v1573
        %v1701 = vsel %vm309, %v1349, %v1575
        %v1702 = vsel %vm309, %v1350, %v1577
        %v1703 = vsel %vm309, %v1351, %v1579
        %v1704 = vsel %vm309, %v1352, %v1581
        %v1705 = vsel %vm309, %v1353, %v1583
        %v1706 = vsel %vm309, %v1354, %v1585
        %v1707 = vsel %vm309, %v1355, %v1587
        %v1708 = vsel %vm309, %v1356, %v1589
        %v1709 = vsel %vm309, %v1357, %v1591
        %v1710 = vsel %vm309, %v1358, %v1593
        %v1711 = vsel %vm309, %v1359, %v1595
        %v1712 = vsel %vm309, %v1360, %v1597
        %v1713 = vsel %vm309, %v1361, %v1599
        %v1714 = vsel %vm309, %v1362, %v1601
        %v1715 = vsel %vm309, %v1363, %v1603
        %v1716 = vsel %vm309, %v1364, %v1605
        %v1717 = vsel %vm309, %v1365, %v1607
        %v1718 = vsel %vm309, %v1366, %v1609
        %v1719 = vsel %vm309, %v1367, %v1611
        %v1720 = vsel %vm309, %v1368, %v1613
        %v1721 = vsel %vm309, %v1369, %v1615
        %v1722 = vsel %vm309, %v1370, %v1617
        %v1723 = vsel %vm309, %v1371, %v1619
        %v1724 = vsel %vm309, %v1372, %v1621
        %v1725 = vsel %vm309, %v1373, %v1623
        %v1726 = vsel %vm309, %v1374, %v1625
        %v1727 = vsel %vm309, %v1375, %v1627
        %v1728 = vsel %vm309, %v1376, %v1629
        %v1729 = vsel %vm309, %v1377, %v1631
        %v1730 = vsel %vm309, %v1378, %v1633
        %v1731 = vsel %vm309, %v1379, %v1635
        %v1732 = vld [vmem:[%s5] sm:$0xff]
        %v1733 = vld [vmem:[%s5 + $0x8] sm:$0xff]
        %v1734 = vld [vmem:[%s5 + $0x10] sm:$0xff]
        %v1735 = vld [vmem:[%s5 + $0x18] sm:$0xff]
        %v1736 = vld [vmem:[%s5 + $0x20] sm:$0xff]
        %v1737 = vld [vmem:[%s5 + $0x28] sm:$0xff]
        %v1738 = vld [vmem:[%s5 + $0x30] sm:$0xff]
        %v1739 = vld [vmem:[%s5 + $0x38] sm:$0xff]
        %v1740 = vld [vmem:[%s5 + $0x40] sm:$0xff]
        %v1741 = vld [vmem:[%s5 + $0x48] sm:$0xff]
        %v1742 = vld [vmem:[%s5 + $0x50] sm:$0xff]
        %v1743 = vld [vmem:[%s5 + $0x58] sm:$0xff]
        %v1744 = vld [vmem:[%s5 + $0x60] sm:$0xff]
        %v1745 = vld [vmem:[%s5 + $0x68] sm:$0xff]
        %v1746 = vld [vmem:[%s5 + $0x70] sm:$0xff]
        %v1747 = vld [vmem:[%s5 + $0x78] sm:$0xff]
        %v1748 = vld [vmem:[%s5 + $0x80] sm:$0xff]
        %v1749 = vld [vmem:[%s5 + $0x88] sm:$0xff]
        %v1750 = vld [vmem:[%s5 + $0x90] sm:$0xff]
        %v1751 = vld [vmem:[%s5 + $0x98] sm:$0xff]
        %v1752 = vld [vmem:[%s5 + $0xa0] sm:$0xff]
        %v1753 = vld [vmem:[%s5 + $0xa8] sm:$0xff]
        %v1754 = vld [vmem:[%s5 + $0xb0] sm:$0xff]
        %v1755 = vld [vmem:[%s5 + $0xb8] sm:$0xff]
        %v1756 = vld [vmem:[%s5 + $0xc0] sm:$0xff]
        %v1757 = vld [vmem:[%s5 + $0xc8] sm:$0xff]
        %v1758 = vld [vmem:[%s5 + $0xd0] sm:$0xff]
        %v1759 = vld [vmem:[%s5 + $0xd8] sm:$0xff]
        %v1760 = vld [vmem:[%s5 + $0xe0] sm:$0xff]
        %v1761 = vld [vmem:[%s5 + $0xe8] sm:$0xff]
        %v1762 = vld [vmem:[%s5 + $0xf0] sm:$0xff]
        %v1763 = vld [vmem:[%s5 + $0xf8] sm:$0xff]
        %v1764 = vld [vmem:[%s6] sm:$0x1]
        %v1766 = vlaneseq
        %v1767 = vshrl.u32 %v1766, 7
        %v1768 = vsub.s32 0, %v1767
        %v1769 = vrot.slane %v1764, %v1768
        %1771 = vmatprep.subr.mxu0 0.0
        %1772 = vmatpush1.msra.mxu0 %v1732
        %1773 = vmatprep.subr.mxu0 0.0
        %1774 = vmatpush1.msra.mxu0 %v1733
        %1775 = vmatprep.subr.mxu0 0.0
        %1776 = vmatpush1.msra.mxu0 %v1734
        %1777 = vmatprep.subr.mxu0 0.0
        %1778 = vmatpush1.msra.mxu0 %v1735
        %1779 = vmatprep.subr.mxu0 0.0
        %1780 = vmatpush1.msra.mxu0 %v1736
        %1781 = vmatprep.subr.mxu0 0.0
        %1782 = vmatpush1.msra.mxu0 %v1737
        %1783 = vmatprep.subr.mxu0 0.0
        %1784 = vmatpush1.msra.mxu0 %v1738
        %1785 = vmatprep.subr.mxu0 0.0
        %1786 = vmatpush1.msra.mxu0 %v1739
        %1787 = vmatprep.subr.mxu0 0.0
        %1788 = vmatpush1.msra.mxu0 %v1740
        %1789 = vmatprep.subr.mxu0 0.0
        %1790 = vmatpush1.msra.mxu0 %v1741
        %1791 = vmatprep.subr.mxu0 0.0
        %1792 = vmatpush1.msra.mxu0 %v1742
        %1793 = vmatprep.subr.mxu0 0.0
        %1794 = vmatpush1.msra.mxu0 %v1743
        %1795 = vmatprep.subr.mxu0 0.0
        %1796 = vmatpush1.msra.mxu0 %v1744
        %1797 = vmatprep.subr.mxu0 0.0
        %1798 = vmatpush1.msra.mxu0 %v1745
        %1799 = vmatprep.subr.mxu0 0.0
        %1800 = vmatpush1.msra.mxu0 %v1746
        %1801 = vmatprep.subr.mxu0 0.0
        %1802 = vmatpush1.msra.mxu0 %v1747
        %1803 = vmatprep.subr.mxu0 0.0
        %1804 = vmatpush1.msra.mxu0 %v1748
        %1805 = vmatprep.subr.mxu0 0.0
        %1806 = vmatpush1.msra.mxu0 %v1749
        %1807 = vmatprep.subr.mxu0 0.0
        %1808 = vmatpush1.msra.mxu0 %v1750
        %1809 = vmatprep.subr.mxu0 0.0
        %1810 = vmatpush1.msra.mxu0 %v1751
        %1811 = vmatprep.subr.mxu0 0.0
        %1812 = vmatpush1.msra.mxu0 %v1752
        %1813 = vmatprep.subr.mxu0 0.0
        %1814 = vmatpush1.msra.mxu0 %v1753
        %1815 = vmatprep.subr.mxu0 0.0
        %1816 = vmatpush1.msra.mxu0 %v1754
        %1817 = vmatprep.subr.mxu0 0.0
        %1818 = vmatpush1.msra.mxu0 %v1755
        %1819 = vmatprep.subr.mxu0 0.0
        %1820 = vmatpush1.msra.mxu0 %v1756
        %1821 = vmatprep.subr.mxu0 0.0
        %1822 = vmatpush1.msra.mxu0 %v1757
        %1823 = vmatprep.subr.mxu0 0.0
        %1824 = vmatpush1.msra.mxu0 %v1758
        %1825 = vmatprep.subr.mxu0 0.0
        %1826 = vmatpush1.msra.mxu0 %v1759
        %1827 = vmatprep.subr.mxu0 0.0
        %1828 = vmatpush1.msra.mxu0 %v1760
        %1829 = vmatprep.subr.mxu0 0.0
        %1830 = vmatpush1.msra.mxu0 %v1761
        %1831 = vmatprep.subr.mxu0 0.0
        %1832 = vmatpush1.msra.mxu0 %v1762
        %1833 = vmatprep.subr.mxu0 0.0
        %1834 = vmatpush1.msra.mxu0 %v1763
        %1835 = vmatprep.mubr.f32.mxu0 %v1700
        %1836 = vmatmul.mubr.f32.gmra.mrb[0].mxu0 %v1668
        %v1837 = vpop.f32.mrb[0].mxu0
        %v1838 = vadd.f32 %v1769, %v1837
        %v1839 = vpop.f32.mrb[0].mxu0
        %1840 = vmatprep.mubr.f32.mxu0 %v1701
        %1841 = vmatmul.mubr.f32.gmra.mrb[0].mxu0 %v1669
        %v1842 = vpop.f32.mrb[0].mxu0
        %v1843 = vadd.f32 %v1769, %v1842
        %v1844 = vpop.f32.mrb[0].mxu0
        %1845 = vmatprep.mubr.f32.mxu0 %v1702
        %1846 = vmatmul.mubr.f32.gmra.mrb[0].mxu0 %v1670
        %v1847 = vpop.f32.mrb[0].mxu0
        %v1848 = vadd.f32 %v1769, %v1847
        %v1849 = vpop.f32.mrb[0].mxu0
        %1850 = vmatprep.mubr.f32.mxu0 %v1703
        %1851 = vmatmul.mubr.f32.gmra.mrb[0].mxu0 %v1671
        %v1852 = vpop.f32.mrb[0].mxu0
        %v1853 = vadd.f32 %v1769, %v1852
        %v1854 = vpop.f32.mrb[0].mxu0
        %1855 = vmatprep.mubr.f32.mxu0 %v1704
        %1856 = vmatmul.mubr.f32.gmra.mrb[0].mxu0 %v1672
        %v1857 = vpop.f32.mrb[0].mxu0
        %v1858 = vadd.f32 %v1769, %v1857
        %v1859 = vpop.f32.mrb[0].mxu0
        %1860 = vmatprep.mubr.f32.mxu0 %v1705
        %1861 = vmatmul.mubr.f32.gmra.mrb[0].mxu0 %v1673
        %v1862 = vpop.f32.mrb[0].mxu0
        %v1863 = vadd.f32 %v1769, %v1862
        %v1864 = vpop.f32.mrb[0].mxu0
        %1865 = vmatprep.mubr.f32.mxu0 %v1706
        %1866 = vmatmul.mubr.f32.gmra.mrb[0].mxu0 %v1674
        %v1867 = vpop.f32.mrb[0].mxu0
        %v1868 = vadd.f32 %v1769, %v1867
        %v1869 = vpop.f32.mrb[0].mxu0
        %1870 = vmatprep.mubr.f32.mxu0 %v1707
        %1871 = vmatmul.mubr.f32.gmra.mrb[0].mxu0 %v1675
        %v1872 = vpop.f32.mrb[0].mxu0
        %v1873 = vadd.f32 %v1769, %v1872
        %v1874 = vpop.f32.mrb[0].mxu0
        %1875 = vmatprep.mubr.f32.mxu0 %v1708
        %1876 = vmatmul.mubr.f32.gmra.mrb[0].mxu0 %v1676
        %v1877 = vpop.f32.mrb[0].mxu0
        %v1878 = vadd.f32 %v1769, %v1877
        %v1879 = vpop.f32.mrb[0].mxu0
        %1880 = vmatprep.mubr.f32.mxu0 %v1709
        %1881 = vmatmul.mubr.f32.gmra.mrb[0].mxu0 %v1677
        %v1882 = vpop.f32.mrb[0].mxu0
        %v1883 = vadd.f32 %v1769, %v1882
        %v1884 = vpop.f32.mrb[0].mxu0
        %1885 = vmatprep.mubr.f32.mxu0 %v1710
        %1886 = vmatmul.mubr.f32.gmra.mrb[0].mxu0 %v1678
        %v1887 = vpop.f32.mrb[0].mxu0
        %v1888 = vadd.f32 %v1769, %v1887
        %v1889 = vpop.f32.mrb[0].mxu0
        %1890 = vmatprep.mubr.f32.mxu0 %v1711
        %1891 = vmatmul.mubr.f32.gmra.mrb[0].mxu0 %v1679
        %v1892 = vpop.f32.mrb[0].mxu0
        %v1893 = vadd.f32 %v1769, %v1892
        %v1894 = vpop.f32.mrb[0].mxu0
        %1895 = vmatprep.mubr.f32.mxu0 %v1712
        %1896 = vmatmul.mubr.f32.gmra.mrb[0].mxu0 %v1680
        %v1897 = vpop.f32.mrb[0].mxu0
        %v1898 = vadd.f32 %v1769, %v1897
        %v1899 = vpop.f32.mrb[0].mxu0
        %1900 = vmatprep.mubr.f32.mxu0 %v1713
        %1901 = vmatmul.mubr.f32.gmra.mrb[0].mxu0 %v1681
        %v1902 = vpop.f32.mrb[0].mxu0
        %v1903 = vadd.f32 %v1769, %v1902
        %v1904 = vpop.f32.mrb[0].mxu0
        %1905 = vmatprep.mubr.f32.mxu0 %v1714
        %1906 = vmatmul.mubr.f32.gmra.mrb[0].mxu0 %v1682
        %v1907 = vpop.f32.mrb[0].mxu0
        %v1908 = vadd.f32 %v1769, %v1907
        %v1909 = vpop.f32.mrb[0].mxu0
        %1910 = vmatprep.mubr.f32.mxu0 %v1715
        %1911 = vmatmul.mubr.f32.gmra.mrb[0].mxu0 %v1683
        %v1912 = vpop.f32.mrb[0].mxu0
        %v1913 = vadd.f32 %v1769, %v1912
        %v1914 = vpop.f32.mrb[0].mxu0
        %1915 = vmatprep.mubr.f32.mxu0 %v1716
        %1916 = vmatmul.mubr.f32.gmra.mrb[0].mxu0 %v1684
        %v1917 = vpop.f32.mrb[0].mxu0
        %v1918 = vadd.f32 %v1769, %v1917
        %v1919 = vpop.f32.mrb[0].mxu0
        %1920 = vmatprep.mubr.f32.mxu0 %v1717
        %1921 = vmatmul.mubr.f32.gmra.mrb[0].mxu0 %v1685
        %v1922 = vpop.f32.mrb[0].mxu0
        %v1923 = vadd.f32 %v1769, %v1922
        %v1924 = vpop.f32.mrb[0].mxu0
        %1925 = vmatprep.mubr.f32.mxu0 %v1718
        %1926 = vmatmul.mubr.f32.gmra.mrb[0].mxu0 %v1686
        %v1927 = vpop.f32.mrb[0].mxu0
        %v1928 = vadd.f32 %v1769, %v1927
        %v1929 = vpop.f32.mrb[0].mxu0
        %1930 = vmatprep.mubr.f32.mxu0 %v1719
        %1931 = vmatmul.mubr.f32.gmra.mrb[0].mxu0 %v1687
        %v1932 = vpop.f32.mrb[0].mxu0
        %v1933 = vadd.f32 %v1769, %v1932
        %v1934 = vpop.f32.mrb[0].mxu0
        %1935 = vmatprep.mubr.f32.mxu0 %v1720
        %1936 = vmatmul.mubr.f32.gmra.mrb[0].mxu0 %v1688
        %v1937 = vpop.f32.mrb[0].mxu0
        %v1938 = vadd.f32 %v1769, %v1937
        %v1939 = vpop.f32.mrb[0].mxu0
        %1940 = vmatprep.mubr.f32.mxu0 %v1721
        %1941 = vmatmul.mubr.f32.gmra.mrb[0].mxu0 %v1689
        %v1942 = vpop.f32.mrb[0].mxu0
        %v1943 = vadd.f32 %v1769, %v1942
        %v1944 = vpop.f32.mrb[0].mxu0
        %1945 = vmatprep.mubr.f32.mxu0 %v1722
        %1946 = vmatmul.mubr.f32.gmra.mrb[0].mxu0 %v1690
        %v1947 = vpop.f32.mrb[0].mxu0
        %v1948 = vadd.f32 %v1769, %v1947
        %v1949 = vpop.f32.mrb[0].mxu0
        %1950 = vmatprep.mubr.f32.mxu0 %v1723
        %1951 = vmatmul.mubr.f32.gmra.mrb[0].mxu0 %v1691
        %v1952 = vpop.f32.mrb[0].mxu0
        %v1953 = vadd.f32 %v1769, %v1952
        %v1954 = vpop.f32.mrb[0].mxu0
        %1955 = vmatprep.mubr.f32.mxu0 %v1724
        %1956 = vmatmul.mubr.f32.gmra.mrb[0].mxu0 %v1692
        %v1957 = vpop.f32.mrb[0].mxu0
        %v1958 = vadd.f32 %v1769, %v1957
        %v1959 = vpop.f32.mrb[0].mxu0
        %1960 = vmatprep.mubr.f32.mxu0 %v1725
        %1961 = vmatmul.mubr.f32.gmra.mrb[0].mxu0 %v1693
        %v1962 = vpop.f32.mrb[0].mxu0
        %v1963 = vadd.f32 %v1769, %v1962
        %v1964 = vpop.f32.mrb[0].mxu0
        %1965 = vmatprep.mubr.f32.mxu0 %v1726
        %1966 = vmatmul.mubr.f32.gmra.mrb[0].mxu0 %v1694
        %v1967 = vpop.f32.mrb[0].mxu0
        %v1968 = vadd.f32 %v1769, %v1967
        %v1969 = vpop.f32.mrb[0].mxu0
        %1970 = vmatprep.mubr.f32.mxu0 %v1727
        %1971 = vmatmul.mubr.f32.gmra.mrb[0].mxu0 %v1695
        %v1972 = vpop.f32.mrb[0].mxu0
        %v1973 = vadd.f32 %v1769, %v1972
        %v1974 = vpop.f32.mrb[0].mxu0
        %1975 = vmatprep.mubr.f32.mxu0 %v1728
        %1976 = vmatmul.mubr.f32.gmra.mrb[0].mxu0 %v1696
        %v1977 = vpop.f32.mrb[0].mxu0
        %v1978 = vadd.f32 %v1769, %v1977
        %v1979 = vpop.f32.mrb[0].mxu0
        %1980 = vmatprep.mubr.f32.mxu0 %v1729
        %1981 = vmatmul.mubr.f32.gmra.mrb[0].mxu0 %v1697
        %v1982 = vpop.f32.mrb[0].mxu0
        %v1983 = vadd.f32 %v1769, %v1982
        %v1984 = vpop.f32.mrb[0].mxu0
        %1985 = vmatprep.mubr.f32.mxu0 %v1730
        %1986 = vmatmul.mubr.f32.gmra.mrb[0].mxu0 %v1698
        %v1987 = vpop.f32.mrb[0].mxu0
        %v1988 = vadd.f32 %v1769, %v1987
        %v1989 = vpop.f32.mrb[0].mxu0
        %1990 = vmatprep.mubr.f32.mxu0 %v1731
        %1991 = vmatmul.mubr.f32.gmra.mrb[0].mxu0 %v1699
        %v1992 = vpop.f32.mrb[0].mxu0
        %v1993 = vadd.f32 %v1769, %v1992
        %v1994 = vpop.f32.mrb[0].mxu0
        %1995 = vdwg.mxu0
        %v1996 = vadd.f32 %v277, %v1838
        %v1997 = vadd.f32 %v278, %v1843
        %v1998 = vadd.f32 %v279, %v1848
        %v1999 = vadd.f32 %v280, %v1853
        %v2000 = vadd.f32 %v281, %v1858
        %v2001 = vadd.f32 %v282, %v1863
        %v2002 = vadd.f32 %v283, %v1868
        %v2003 = vadd.f32 %v284, %v1873
        %v2004 = vadd.f32 %v285, %v1878
        %v2005 = vadd.f32 %v286, %v1883
        %v2006 = vadd.f32 %v287, %v1888
        %v2007 = vadd.f32 %v288, %v1893
        %v2008 = vadd.f32 %v289, %v1898
        %v2009 = vadd.f32 %v290, %v1903
        %v2010 = vadd.f32 %v291, %v1908
        %v2011 = vadd.f32 %v292, %v1913
        %v2012 = vadd.f32 %v293, %v1918
        %v2013 = vadd.f32 %v294, %v1923
        %v2014 = vadd.f32 %v295, %v1928
        %v2015 = vadd.f32 %v296, %v1933
        %v2016 = vadd.f32 %v297, %v1938
        %v2017 = vadd.f32 %v298, %v1943
        %v2018 = vadd.f32 %v299, %v1948
        %v2019 = vadd.f32 %v300, %v1953
        %v2020 = vadd.f32 %v301, %v1958
        %v2021 = vadd.f32 %v302, %v1963
        %v2022 = vadd.f32 %v303, %v1968
        %v2023 = vadd.f32 %v304, %v1973
        %v2024 = vadd.f32 %v305, %v1978
        %v2025 = vadd.f32 %v306, %v1983
        %v2026 = vadd.f32 %v307, %v1988
        %v2027 = vadd.f32 %v308, %v1993
        %2028 = vst.msk [vmem:[%s271] sm:$0xff] %vm309, %v1996
        %2029 = vst.msk [vmem:[%s271 + $0x8] sm:$0xff] %vm309, %v1997
        %2030 = vst.msk [vmem:[%s271 + $0x10] sm:$0xff] %vm309, %v1998
        %2031 = vst.msk [vmem:[%s271 + $0x18] sm:$0xff] %vm309, %v1999
        %2032 = vst.msk [vmem:[%s271 + $0x20] sm:$0xff] %vm309, %v2000
        %2033 = vst.msk [vmem:[%s271 + $0x28] sm:$0xff] %vm309, %v2001
        %2034 = vst.msk [vmem:[%s271 + $0x30] sm:$0xff] %vm309, %v2002
        %2035 = vst.msk [vmem:[%s271 + $0x38] sm:$0xff] %vm309, %v2003
        %2036 = vst.msk [vmem:[%s271 + $0x40] sm:$0xff] %vm309, %v2004
        %2037 = vst.msk [vmem:[%s271 + $0x48] sm:$0xff] %vm309, %v2005
        %2038 = vst.msk [vmem:[%s271 + $0x50] sm:$0xff] %vm309, %v2006
        %2039 = vst.msk [vmem:[%s271 + $0x58] sm:$0xff] %vm309, %v2007
        %2040 = vst.msk [vmem:[%s271 + $0x60] sm:$0xff] %vm309, %v2008
        %2041 = vst.msk [vmem:[%s271 + $0x68] sm:$0xff] %vm309, %v2009
        %2042 = vst.msk [vmem:[%s271 + $0x70] sm:$0xff] %vm309, %v2010
        %2043 = vst.msk [vmem:[%s271 + $0x78] sm:$0xff] %vm309, %v2011
        %2044 = vst.msk [vmem:[%s271 + $0x80] sm:$0xff] %vm309, %v2012
        %2045 = vst.msk [vmem:[%s271 + $0x88] sm:$0xff] %vm309, %v2013
        %2046 = vst.msk [vmem:[%s271 + $0x90] sm:$0xff] %vm309, %v2014
        %2047 = vst.msk [vmem:[%s271 + $0x98] sm:$0xff] %vm309, %v2015
        %2048 = vst.msk [vmem:[%s271 + $0xa0] sm:$0xff] %vm309, %v2016
        %2049 = vst.msk [vmem:[%s271 + $0xa8] sm:$0xff] %vm309, %v2017
        %2050 = vst.msk [vmem:[%s271 + $0xb0] sm:$0xff] %vm309, %v2018
        %2051 = vst.msk [vmem:[%s271 + $0xb8] sm:$0xff] %vm309, %v2019
        %2052 = vst.msk [vmem:[%s271 + $0xc0] sm:$0xff] %vm309, %v2020
        %2053 = vst.msk [vmem:[%s271 + $0xc8] sm:$0xff] %vm309, %v2021
        %2054 = vst.msk [vmem:[%s271 + $0xd0] sm:$0xff] %vm309, %v2022
        %2055 = vst.msk [vmem:[%s271 + $0xd8] sm:$0xff] %vm309, %v2023
        %2056 = vst.msk [vmem:[%s271 + $0xe0] sm:$0xff] %vm309, %v2024
        %2057 = vst.msk [vmem:[%s271 + $0xe8] sm:$0xff] %vm309, %v2025
        %2058 = vst.msk [vmem:[%s271 + $0xf0] sm:$0xff] %vm309, %v2026
        %2059 = vst.msk [vmem:[%s271 + $0xf8] sm:$0xff] %vm309, %v2027
        %s2060 = sand.u32 %s181, 1
        %s2061 = scalar_lea.sflag [#allocation4], %s2060
        %s2062 = sand.u32 %s181, 1
        %s2063 = smul.addr %s2062, 256
        %s2064 = scalar_lea.vmem [#allocation3], %s2063
        // Predicated region
        $region49: #{_lambda_.1} parent=47 // pred_check
          %p2065 = pneg %p191
        $region50: #{_lambda_.1} parent=47 // pred_check_branch
          %2067 = sbr.rel (%p2065) target = $region52
        $region51: #{_lambda_.1} parent=47 // pred_region
          %s2069 = ssub.s32 4096, 4096
          %2070 = vsyncadd %s2061, %s2069
          %s2071 = smul.addr %s21, 32
          %s2072 = smul.addr %s2071, 128
          %s2073 = scalar_lea.hbm %s7, %s2072
          %s2074 = sshll.u32 %s2064, 4
          %s2075 = int_to_ptr.vmem [resolvable:$true] %s2074
          %2080 = dma.vmem_to_hbm [thread:$0]  %s2075, 4096, %s2073, %s2061, 128, 128, 8
        $region52: #{_lambda_.1} parent=47 // pred_fallthru
          _
      $region48: #{_lambda_.1} parent=5 // pred_fallthru
        _
      %p2081 = scmp.le.s32.totalorder 2, %s16
      // Predicated region
      $region53: #{_lambda_.1} parent=5 // pred_check
        %p2082 = pneg %p2081
      $region54: #{_lambda_.1} parent=5 // pred_check_branch
        %2084 = sbr.rel (%p2082) target = $region56
      $region55: #{_lambda_.1} parent=5 // pred_region
        %s2085 = ssub.s32 %s16, 2
        // Predicated region
        $region57: #{_lambda_.1} parent=55 // pred_check
          %p2086 = pneg %p197
        $region58: #{_lambda_.1} parent=55 // pred_check_branch
          %2088 = sbr.rel (%p2086) target = $region60
        $region59: #{_lambda_.1} parent=55 // pred_region
          %s2089 = sand.u32 %s182, 1
          %s2090 = scalar_lea.sflag [#allocation4], %s2089
          %s2091 = sand.u32 %s182, 1
          %s2092 = smul.addr %s2091, 256
          %s2093 = scalar_lea.vmem [#allocation3], %s2092
          %2094 = dma.done %s2090, 4096
        $region60: #{_lambda_.1} parent=55 // pred_fallthru
          _
      $region56: #{_lambda_.1} parent=5 // pred_fallthru
        _
    $region6: #{_lambda_.1} parent=1 // loop_footer
      %s20 = sadd.s32 1, %s16
    $region7: #{_lambda_.1} parent=1 // loop_footer_branch
      %15 = sbr.rel target = $region3
    $region8: #{_lambda_.1} parent=1 // loop_exit
      _
    %2095 = vsyncpa [#allocation4], 1
    %s2096 = scalar_lea.sflag [#allocation4], 1
    %2097 = vsyncpa %s2096, 1

</llo_original>
